<compile_context>
chip_gen: v7x
topology: tpu7x:2x2x1
jax: 0.10.0
libtpu: 0.0.40
codegen_flags: <defaults>
</compile_context>

<pallas_src>
import jax
import jax.numpy as jnp
from jax.experimental import pallas as pl
from jax.experimental.pallas import tpu as pltpu


NEG_SLOPE = 0.01      # nn.LeakyReLU default negative_slope
LANE_PAD = 128        # lane-pad the class dim of the *weight* for the MXU


def _head_kernel(x_ref, w_ref, b_ref, o_ref):
    # x_ref: (TB, D) f32    w_ref: (D, CP) bf16 (resident)
    # b_ref: (1, CP) f32 (resident)             o_ref: (TB, C) f32
    x_bf = x_ref[...].astype(jnp.bfloat16)          # free VPU cast, saves HBM
    y = jnp.dot(x_bf, w_ref[...], preferred_element_type=jnp.float32)  # (TB, CP)
    y = y + b_ref[...]                              # broadcast bias (f32)
    y = jnp.where(y > 0, y, NEG_SLOPE * y)          # LeakyReLU (f32 epilogue)
    # Narrow (masked) store of the real classes only; padding lanes dropped.
    o_ref[...] = y[:, : o_ref.shape[1]].astype(o_ref.dtype)


def prepare_head_params(w, b):
    """One-time prep of static params: transposed, lane-padded bf16 weight + f32 bias.

    w: (C, D) f32 fc1.weight (PyTorch layout).   b: (C,) f32 fc1.bias.
    Returns (w_bf: (D, CP) bf16, b2d: (1, CP) f32).
    """
    C, D = w.shape
    CP = max(LANE_PAD, pl.cdiv(C, LANE_PAD) * LANE_PAD)
    w_bf = jnp.zeros((D, CP), jnp.bfloat16).at[:, :C].set(w.T.astype(jnp.bfloat16))
    b2d = jnp.zeros((1, CP), jnp.float32).at[0, :C].set(b.astype(jnp.float32))
    return w_bf, b2d


def _pick_batch_tile(B, D, block_b):
    # Keep double-buffered f32 x tiles under ~12 MiB so the kernel fits the
    # smallest default scoped-VMEM budget (16 MiB on v5e) with headroom for the
    # resident weight/bias and the (tiny) double-buffered output.
    budget = 12 * 1024 * 1024
    cap = max(8, budget // (2 * D * 4))
    b8 = pl.cdiv(B, 8) * 8
    tb = min(int(block_b), cap, b8)
    tb = max(8, (tb // 8) * 8)
    return tb


def classification_head4(x, w_bf, b2d, num_classes, *, block_b=2048):
    """Forward of ClassificationHead4: leaky_relu(x @ W.T + b).

    x:    (B, D) f32 activations.
    w_bf: (D, CP) bf16 prepared weight (from prepare_head_params).
    b2d:  (1, CP) f32 prepared bias.
    Returns (B, num_classes) f32.
    """
    B, D = x.shape
    C = int(num_classes)
    CP = w_bf.shape[1]

    TB = _pick_batch_tile(B, D, block_b)
    Bp = pl.cdiv(B, TB) * TB
    if Bp != B:
        # Rare path: only when B is not a multiple of the batch tile.
        # Padded rows produce leaky_relu(bias) garbage, sliced off below.
        x = jnp.pad(x, ((0, Bp - B), (0, 0)))

    grid = (Bp // TB,)

    out = pl.pallas_call(
        _head_kernel,
        out_shape=jax.ShapeDtypeStruct((Bp, C), jnp.float32),
        grid_spec=pl.GridSpec(
            grid=grid,
            in_specs=[
                # x streams over the batch axis (f32 straight from HBM).
                pl.BlockSpec((TB, D), lambda i: (i, 0)),
                # weight / bias stay resident across all grid steps.
                pl.BlockSpec((D, CP), lambda i: (0, 0)),
                pl.BlockSpec((1, CP), lambda i: (0, 0)),
            ],
            # Narrow output: block last dim == full array dim C (legal), so no
            # padded slab is written and no wrapper slice pass is needed.
            out_specs=pl.BlockSpec((TB, C), lambda i: (i, 0)),
        ),
        compiler_params=pltpu.CompilerParams(
            # Batch axis is independent -> shard across TCs on v7x megacore.
            dimension_semantics=("parallel",),
        ),
    )(x, w_bf, b2d)

    if Bp != B:
        out = out[:B]
    return out


def reference(x, w, b):
    # Same explicit bf16-input / f32-accumulate contract as the kernel.
    xb = x.astype(jnp.bfloat16).astype(jnp.float32)
    wb = w.astype(jnp.bfloat16).astype(jnp.float32)
    y = jnp.dot(xb, wb.T, precision=jax.lax.Precision.HIGHEST) + b
    return jnp.where(y > 0, y, NEG_SLOPE * y)


if __name__ == "__main__":
    # Small shapes consistent with the module's forward: (batch, input_dim).
    batch, input_dim, num_classes = 512, 1024, 3

    key = jax.random.PRNGKey(0)
    kx, kw, kb = jax.random.split(key, 3)

    # PyTorch Linear default init: U(-1/sqrt(D), 1/sqrt(D)).
    bound = 1.0 / (input_dim ** 0.5)
    w = jax.random.uniform(kw, (num_classes, input_dim), jnp.float32, -bound, bound)
    b = jax.random.uniform(kb, (num_classes,), jnp.float32, -bound, bound)
    x = jax.random.normal(kx, (batch, input_dim), jnp.float32)

    # One-time static-parameter prep (hoisted out of the per-call path).
    w_bf, b2d = prepare_head_params(w, b)

    out = jax.block_until_ready(
        classification_head4(x, w_bf, b2d, num_classes))

    ref = reference(x, w, b)
    assert out.shape == (batch, num_classes)
    assert jnp.allclose(out, ref, atol=1e-3, rtol=1e-3), "mismatch vs reference"

    print("KERNEL_OK")
</pallas_src>

<mosaic_0001>
module attributes {stable_mosaic.version = 11 : i64} {
  func.func @_head_kernel(%arg0: i32, %arg1: memref<512x1024xf32, #tpu.memory_space<vmem>>, %arg2: memref<1024x128xbf16, #tpu.memory_space<vmem>>, %arg3: memref<1x128xf32, #tpu.memory_space<vmem>>, %arg4: memref<512x3xf32, #tpu.memory_space<vmem>>) attributes {dimension_semantics = [#tpu.dimension_semantics<parallel>], iteration_bounds = array<i64: 1>, scalar_prefetch = 0 : i64, scratch_operands = 0 : i64, tpu.core_type = #tpu.core_type<tc>, window_params = [{transform_indices = @transform_0, window_bounds = array<i64: 512, 1024>}, {pipeline_mode = #tpu.pipeline_mode<synchronous>, transform_indices = @transform_1, window_bounds = array<i64: 1024, 128>}, {pipeline_mode = #tpu.pipeline_mode<synchronous>, transform_indices = @transform_2, window_bounds = array<i64: 1, 128>}, {transform_indices = @transform_3, window_bounds = array<i64: 512, 3>}]} {
    %c0 = arith.constant 0 : index
    %c0_0 = arith.constant 0 : index
    %0 = vector.load %arg1[%c0, %c0_0] : memref<512x1024xf32, #tpu.memory_space<vmem>>, vector<512x1024xf32>
    %1 = arith.truncf %0 : vector<512x1024xf32> to vector<512x1024xbf16>
    %c0_1 = arith.constant 0 : index
    %c0_2 = arith.constant 0 : index
    %2 = vector.load %arg2[%c0_1, %c0_2] : memref<1024x128xbf16, #tpu.memory_space<vmem>>, vector<1024x128xbf16>
    %cst = arith.constant dense<0.000000e+00> : vector<512x128xf32>
    %3 = tpu.matmul %1, %2, %cst {dimension_numbers = #tpu.dot_dimension_numbers<[1], [0], [0], [1], [0, 0, 1, 1], [], []>} : vector<512x1024xbf16>, vector<1024x128xbf16>, vector<512x128xf32> -> vector<512x128xf32>
    %c0_3 = arith.constant 0 : index
    %c0_4 = arith.constant 0 : index
    %4 = vector.load %arg3[%c0_3, %c0_4] : memref<1x128xf32, #tpu.memory_space<vmem>>, vector<1x128xf32>
    %5 = vector.broadcast %4 : vector<1x128xf32> to vector<512x128xf32>
    %6 = arith.addf %3, %5 : vector<512x128xf32>
    %cst_5 = arith.constant 0.000000e+00 : f32
    %7 = vector.broadcast %cst_5 : f32 to vector<512x128xf32>
    %8 = arith.cmpf ogt, %6, %7 : vector<512x128xf32>
    %cst_6 = arith.constant 0.00999999977 : f32
    %9 = vector.broadcast %cst_6 : f32 to vector<512x128xf32>
    %10 = arith.mulf %9, %6 : vector<512x128xf32>
    %11 = arith.select %8, %6, %10 : vector<512x128xi1>, vector<512x128xf32>
    %12 = vector.extract_strided_slice %11 {offsets = [0, 0], sizes = [512, 3], strides = [1, 1]} : vector<512x128xf32> to vector<512x3xf32>
    %c0_7 = arith.constant 0 : index
    %c0_8 = arith.constant 0 : index
    %13 = vector.load %arg4[%c0_7, %c0_8] : memref<512x3xf32, #tpu.memory_space<vmem>>, vector<512x3xf32>
    tpu.vector_store %arg4[%c0_7, %c0_8], %12 {strides = array<i32>} : memref<512x3xf32, #tpu.memory_space<vmem>>, vector<512x3xf32>,
    return
  }
  func.func @transform_0(%arg0: i32) -> (i32, i32) {
    %c0_i32 = arith.constant 0 : i32
    %c0_i32_0 = arith.constant 0 : i32
    return %arg0, %c0_i32 : i32, i32
  }
  func.func @transform_1(%arg0: i32) -> (i32, i32) {
    %c0_i32 = arith.constant 0 : i32
    %c0_i32_0 = arith.constant 0 : i32
    %c0_i32_1 = arith.constant 0 : i32
    return %c0_i32, %c0_i32_0 : i32, i32
  }
  func.func @transform_2(%arg0: i32) -> (i32, i32) {
    %c0_i32 = arith.constant 0 : i32
    %c0_i32_0 = arith.constant 0 : i32
    %c0_i32_1 = arith.constant 0 : i32
    return %c0_i32, %c0_i32_0 : i32, i32
  }
  func.func @transform_3(%arg0: i32) -> (i32, i32) {
    %c0_i32 = arith.constant 0 : i32
    %c0_i32_0 = arith.constant 0 : i32
    return %arg0, %c0_i32 : i32, i32
  }
}

</mosaic_0001>

<llo_original>
// kernel: tpu_custom_call.1
$region0: #{tpu_custom_call.1}
  #allocation0 [shape = 'u32[]', space=smem, size = 0x4, offset = 0x4, fixed_abs, tag = 'smem constant byte address 0x4 - core index']
  #allocation1 [shape = 'u32[144,128]{1,0:T(1,128)}', space=vmem, size = 0x12000, scoped, tag = 'internal scratch']
  %s0 = inlined_call_operand.hbm [shape: f32[512,1024], index: 0, kind: input, shape index: {}]
  %s1 = inlined_call_operand.hbm [shape: bf16[1024,128], index: 1, kind: input, shape index: {}]
  %s2 = inlined_call_operand.hbm [shape: f32[1,128], index: 2, kind: input, shape index: {}]
  %s3 = inlined_call_operand.vmem [shape: f32[512,3], index: 3, kind: output, shape index: {}]
  %s4 = sld [smem:[#allocation0]]
  $region34: #{tpu_custom_call.1} parent=0
    _
  %s6 = ssub.s32 1, %s4
  %s7 = scalar_select 0, %s6, %s4
  $region1: #{tpu_custom_call.1} parent=0
    #allocation2 [shape = 'u8[2097152]{0}', space=vmem, size = 0x200000, scoped, tag = 'input window, operand 0, single buffered']
    #allocation3 [shape = 's32[1]{0}', space=sflag, size = 0x4, scoped, tag = 'scoped memory for tpu_custom_call.1']
    #allocation4 [shape = 'u8[262144]{0}', space=vmem, size = 0x40000, scoped, tag = 'input window, operand 1, single buffered']
    #allocation5 [shape = 's32[1]{0}', space=sflag, size = 0x4, scoped, tag = 'scoped memory for tpu_custom_call.1']
    #allocation6 [shape = 'u8[512]{0}', space=vmem, size = 0x400, scoped, tag = 'input window, operand 2, single buffered']
    %8 = vsyncpa [#allocation3], 0
    %9 = vsyncpa [#allocation5], 0
    // Predicated region
    $region2: #{tpu_custom_call.1} parent=1 // pred_check
      _
    $region3: #{tpu_custom_call.1} parent=1 // pred_check_branch
      %11 = sbr.rel (0) target = $region5
    $region4: #{tpu_custom_call.1} parent=1 // pred_region
      %s13 = ssub.s32 65536, 65536
      %14 = vsyncadd [#allocation3], %s13
      %s15 = sshll.u32 [#allocation2], 4
      %s16 = int_to_ptr.vmem [resolvable:$true] %s15
      %21 = dma.hbm_to_vmem [thread:$0]  %s0, 65536, %s16, [#allocation3], 1024, 1024, 64
    $region5: #{tpu_custom_call.1} parent=1 // pred_fallthru
      _
    // Predicated region
    $region6: #{tpu_custom_call.1} parent=1 // pred_check
      _
    $region7: #{tpu_custom_call.1} parent=1 // pred_check_branch
      %23 = sbr.rel (0) target = $region9
    $region8: #{tpu_custom_call.1} parent=1 // pred_region
      %s25 = ssub.s32 8192, 8192
      %26 = vsyncadd [#allocation5], %s25
      %s27 = sshll.u32 [#allocation4], 4
      %s28 = int_to_ptr.vmem [resolvable:$true] %s27
      %33 = dma.hbm_to_vmem [thread:$0]  %s1, 8192, %s28, [#allocation5], 64, 64, 4
    $region9: #{tpu_custom_call.1} parent=1 // pred_fallthru
      _
    // Predicated region
    $region10: #{tpu_custom_call.1} parent=1 // pred_check
      _
    $region11: #{tpu_custom_call.1} parent=1 // pred_check_branch
      %35 = sbr.rel (0) target = $region13
    $region12: #{tpu_custom_call.1} parent=1 // pred_region
      %s37 = ssub.s32 16, 16
      %38 = vsyncadd [#allocation5], %s37
      %s40 = sshll.u32 [#allocation6], 4
      %s41 = int_to_ptr.vmem [resolvable:$true] %s40
      %43 = dma.hbm_to_vmem [thread:$0]  %s2, 16, %s41, [#allocation5]
    $region13: #{tpu_custom_call.1} parent=1 // pred_fallthru
      _
    // Predicated region
    $region14: #{tpu_custom_call.1} parent=1 // pred_check
      _
    $region15: #{tpu_custom_call.1} parent=1 // pred_check_branch
      %45 = sbr.rel (0) target = $region17
    $region16: #{tpu_custom_call.1} parent=1 // pred_region
      %46 = dma.done [#allocation3], 65536
    $region17: #{tpu_custom_call.1} parent=1 // pred_fallthru
      _
    // Predicated region
    $region18: #{tpu_custom_call.1} parent=1 // pred_check
      _
    $region19: #{tpu_custom_call.1} parent=1 // pred_check_branch
      %48 = sbr.rel (0) target = $region21
    $region20: #{tpu_custom_call.1} parent=1 // pred_region
      %49 = dma.done [#allocation5], 8192
    $region21: #{tpu_custom_call.1} parent=1 // pred_fallthru
      _
    // Predicated region
    $region22: #{tpu_custom_call.1} parent=1 // pred_check
      _
    $region23: #{tpu_custom_call.1} parent=1 // pred_check_branch
      %51 = sbr.rel (0) target = $region25
    $region24: #{tpu_custom_call.1} parent=1 // pred_region
      %52 = dma.done [#allocation5], 16
    $region25: #{tpu_custom_call.1} parent=1 // pred_fallthru
      _
    %v54 = vld [vmem:[#allocation2] sm:$0xff]
    %v55 = vld [vmem:[#allocation2 + $0x8] sm:$0xff]
    %v56 = vld [vmem:[#allocation2 + $0x10] sm:$0xff]
    %v57 = vld [vmem:[#allocation2 + $0x18] sm:$0xff]
    %v58 = vld [vmem:[#allocation2 + $0x20] sm:$0xff]
    %v59 = vld [vmem:[#allocation2 + $0x28] sm:$0xff]
    %v60 = vld [vmem:[#allocation2 + $0x30] sm:$0xff]
    %v61 = vld [vmem:[#allocation2 + $0x38] sm:$0xff]
    %v62 = vld [vmem:[#allocation2 + $0x40] sm:$0xff]
    %v63 = vld [vmem:[#allocation2 + $0x48] sm:$0xff]
    %v64 = vld [vmem:[#allocation2 + $0x50] sm:$0xff]
    %v65 = vld [vmem:[#allocation2 + $0x58] sm:$0xff]
    %v66 = vld [vmem:[#allocation2 + $0x60] sm:$0xff]
    %v67 = vld [vmem:[#allocation2 + $0x68] sm:$0xff]
    %v68 = vld [vmem:[#allocation2 + $0x70] sm:$0xff]
    %v69 = vld [vmem:[#allocation2 + $0x78] sm:$0xff]
    %v70 = vld [vmem:[#allocation2 + $0x80] sm:$0xff]
    %v71 = vld [vmem:[#allocation2 + $0x88] sm:$0xff]
    %v72 = vld [vmem:[#allocation2 + $0x90] sm:$0xff]
    %v73 = vld [vmem:[#allocation2 + $0x98] sm:$0xff]
    %v74 = vld [vmem:[#allocation2 + $0xa0] sm:$0xff]
    %v75 = vld [vmem:[#allocation2 + $0xa8] sm:$0xff]
    %v76 = vld [vmem:[#allocation2 + $0xb0] sm:$0xff]
    %v77 = vld [vmem:[#allocation2 + $0xb8] sm:$0xff]
    %v78 = vld [vmem:[#allocation2 + $0xc0] sm:$0xff]
    %v79 = vld [vmem:[#allocation2 + $0xc8] sm:$0xff]
    %v80 = vld [vmem:[#allocation2 + $0xd0] sm:$0xff]
    %v81 = vld [vmem:[#allocation2 + $0xd8] sm:$0xff]
    %v82 = vld [vmem:[#allocation2 + $0xe0] sm:$0xff]
    %v83 = vld [vmem:[#allocation2 + $0xe8] sm:$0xff]
    %v84 = vld [vmem:[#allocation2 + $0xf0] sm:$0xff]
    %v85 = vld [vmem:[#allocation2 + $0xf8] sm:$0xff]
    %v86 = vld [vmem:[#allocation2 + $0x100] sm:$0xff]
    %v87 = vld [vmem:[#allocation2 + $0x108] sm:$0xff]
    %v88 = vld [vmem:[#allocation2 + $0x110] sm:$0xff]
    %v89 = vld [vmem:[#allocation2 + $0x118] sm:$0xff]
    %v90 = vld [vmem:[#allocation2 + $0x120] sm:$0xff]
    %v91 = vld [vmem:[#allocation2 + $0x128] sm:$0xff]
    %v92 = vld [vmem:[#allocation2 + $0x130] sm:$0xff]
    %v93 = vld [vmem:[#allocation2 + $0x138] sm:$0xff]
    %v94 = vld [vmem:[#allocation2 + $0x140] sm:$0xff]
    %v95 = vld [vmem:[#allocation2 + $0x148] sm:$0xff]
    %v96 = vld [vmem:[#allocation2 + $0x150] sm:$0xff]
    %v97 = vld [vmem:[#allocation2 + $0x158] sm:$0xff]
    %v98 = vld [vmem:[#allocation2 + $0x160] sm:$0xff]
    %v99 = vld [vmem:[#allocation2 + $0x168] sm:$0xff]
    %v100 = vld [vmem:[#allocation2 + $0x170] sm:$0xff]
    %v101 = vld [vmem:[#allocation2 + $0x178] sm:$0xff]
    %v102 = vld [vmem:[#allocation2 + $0x180] sm:$0xff]
    %v103 = vld [vmem:[#allocation2 + $0x188] sm:$0xff]
    %v104 = vld [vmem:[#allocation2 + $0x190] sm:$0xff]
    %v105 = vld [vmem:[#allocation2 + $0x198] sm:$0xff]
    %v106 = vld [vmem:[#allocation2 + $0x1a0] sm:$0xff]
    %v107 = vld [vmem:[#allocation2 + $0x1a8] sm:$0xff]
    %v108 = vld [vmem:[#allocation2 + $0x1b0] sm:$0xff]
    %v109 = vld [vmem:[#allocation2 + $0x1b8] sm:$0xff]
    %v110 = vld [vmem:[#allocation2 + $0x1c0] sm:$0xff]
    %v111 = vld [vmem:[#allocation2 + $0x1c8] sm:$0xff]
    %v112 = vld [vmem:[#allocation2 + $0x1d0] sm:$0xff]
    %v113 = vld [vmem:[#allocation2 + $0x1d8] sm:$0xff]
    %v114 = vld [vmem:[#allocation2 + $0x1e0] sm:$0xff]
    %v115 = vld [vmem:[#allocation2 + $0x1e8] sm:$0xff]
    %v116 = vld [vmem:[#allocation2 + $0x1f0] sm:$0xff]
    %v117 = vld [vmem:[#allocation2 + $0x1f8] sm:$0xff]
    %v118 = vld [vmem:[#allocation2 + $0x200] sm:$0xff]
    %v119 = vld [vmem:[#allocation2 + $0x208] sm:$0xff]
    %v120 = vld [vmem:[#allocation2 + $0x210] sm:$0xff]
    %v121 = vld [vmem:[#allocation2 + $0x218] sm:$0xff]
    %v122 = vld [vmem:[#allocation2 + $0x220] sm:$0xff]
    %v123 = vld [vmem:[#allocation2 + $0x228] sm:$0xff]
    %v124 = vld [vmem:[#allocation2 + $0x230] sm:$0xff]
    %v125 = vld [vmem:[#allocation2 + $0x238] sm:$0xff]
    %v126 = vld [vmem:[#allocation2 + $0x240] sm:$0xff]
    %v127 = vld [vmem:[#allocation2 + $0x248] sm:$0xff]
    %v128 = vld [vmem:[#allocation2 + $0x250] sm:$0xff]
    %v129 = vld [vmem:[#allocation2 + $0x258] sm:$0xff]
    %v130 = vld [vmem:[#allocation2 + $0x260] sm:$0xff]
    %v131 = vld [vmem:[#allocation2 + $0x268] sm:$0xff]
    %v132 = vld [vmem:[#allocation2 + $0x270] sm:$0xff]
    %v133 = vld [vmem:[#allocation2 + $0x278] sm:$0xff]
    %v134 = vld [vmem:[#allocation2 + $0x280] sm:$0xff]
    %v135 = vld [vmem:[#allocation2 + $0x288] sm:$0xff]
    %v136 = vld [vmem:[#allocation2 + $0x290] sm:$0xff]
    %v137 = vld [vmem:[#allocation2 + $0x298] sm:$0xff]
    %v138 = vld [vmem:[#allocation2 + $0x2a0] sm:$0xff]
    %v139 = vld [vmem:[#allocation2 + $0x2a8] sm:$0xff]
    %v140 = vld [vmem:[#allocation2 + $0x2b0] sm:$0xff]
    %v141 = vld [vmem:[#allocation2 + $0x2b8] sm:$0xff]
    %v142 = vld [vmem:[#allocation2 + $0x2c0] sm:$0xff]
    %v143 = vld [vmem:[#allocation2 + $0x2c8] sm:$0xff]
    %v144 = vld [vmem:[#allocation2 + $0x2d0] sm:$0xff]
    %v145 = vld [vmem:[#allocation2 + $0x2d8] sm:$0xff]
    %v146 = vld [vmem:[#allocation2 + $0x2e0] sm:$0xff]
    %v147 = vld [vmem:[#allocation2 + $0x2e8] sm:$0xff]
    %v148 = vld [vmem:[#allocation2 + $0x2f0] sm:$0xff]
    %v149 = vld [vmem:[#allocation2 + $0x2f8] sm:$0xff]
    %v150 = vld [vmem:[#allocation2 + $0x300] sm:$0xff]
    %v151 = vld [vmem:[#allocation2 + $0x308] sm:$0xff]
    %v152 = vld [vmem:[#allocation2 + $0x310] sm:$0xff]
    %v153 = vld [vmem:[#allocation2 + $0x318] sm:$0xff]
    %v154 = vld [vmem:[#allocation2 + $0x320] sm:$0xff]
    %v155 = vld [vmem:[#allocation2 + $0x328] sm:$0xff]
    %v156 = vld [vmem:[#allocation2 + $0x330] sm:$0xff]
    %v157 = vld [vmem:[#allocation2 + $0x338] sm:$0xff]
    %v158 = vld [vmem:[#allocation2 + $0x340] sm:$0xff]
    %v159 = vld [vmem:[#allocation2 + $0x348] sm:$0xff]
    %v160 = vld [vmem:[#allocation2 + $0x350] sm:$0xff]
    %v161 = vld [vmem:[#allocation2 + $0x358] sm:$0xff]
    %v162 = vld [vmem:[#allocation2 + $0x360] sm:$0xff]
    %v163 = vld [vmem:[#allocation2 + $0x368] sm:$0xff]
    %v164 = vld [vmem:[#allocation2 + $0x370] sm:$0xff]
    %v165 = vld [vmem:[#allocation2 + $0x378] sm:$0xff]
    %v166 = vld [vmem:[#allocation2 + $0x380] sm:$0xff]
    %v167 = vld [vmem:[#allocation2 + $0x388] sm:$0xff]
    %v168 = vld [vmem:[#allocation2 + $0x390] sm:$0xff]
    %v169 = vld [vmem:[#allocation2 + $0x398] sm:$0xff]
    %v170 = vld [vmem:[#allocation2 + $0x3a0] sm:$0xff]
    %v171 = vld [vmem:[#allocation2 + $0x3a8] sm:$0xff]
    %v172 = vld [vmem:[#allocation2 + $0x3b0] sm:$0xff]
    %v173 = vld [vmem:[#allocation2 + $0x3b8] sm:$0xff]
    %v174 = vld [vmem:[#allocation2 + $0x3c0] sm:$0xff]
    %v175 = vld [vmem:[#allocation2 + $0x3c8] sm:$0xff]
    %v176 = vld [vmem:[#allocation2 + $0x3d0] sm:$0xff]
    %v177 = vld [vmem:[#allocation2 + $0x3d8] sm:$0xff]
    %v178 = vld [vmem:[#allocation2 + $0x3e0] sm:$0xff]
    %v179 = vld [vmem:[#allocation2 + $0x3e8] sm:$0xff]
    %v180 = vld [vmem:[#allocation2 + $0x3f0] sm:$0xff]
    %v181 = vld [vmem:[#allocation2 + $0x3f8] sm:$0xff]
    %v182 = vld [vmem:[#allocation2 + $0x400] sm:$0xff]
    %v183 = vld [vmem:[#allocation2 + $0x408] sm:$0xff]
    %v184 = vld [vmem:[#allocation2 + $0x410] sm:$0xff]
    %v185 = vld [vmem:[#allocation2 + $0x418] sm:$0xff]
    %v186 = vld [vmem:[#allocation2 + $0x420] sm:$0xff]
    %v187 = vld [vmem:[#allocation2 + $0x428] sm:$0xff]
    %v188 = vld [vmem:[#allocation2 + $0x430] sm:$0xff]
    %v189 = vld [vmem:[#allocation2 + $0x438] sm:$0xff]
    %v190 = vld [vmem:[#allocation2 + $0x440] sm:$0xff]
    %v191 = vld [vmem:[#allocation2 + $0x448] sm:$0xff]
    %v192 = vld [vmem:[#allocation2 + $0x450] sm:$0xff]
    %v193 = vld [vmem:[#allocation2 + $0x458] sm:$0xff]
    %v194 = vld [vmem:[#allocation2 + $0x460] sm:$0xff]
    %v195 = vld [vmem:[#allocation2 + $0x468] sm:$0xff]
    %v196 = vld [vmem:[#allocation2 + $0x470] sm:$0xff]
    %v197 = vld [vmem:[#allocation2 + $0x478] sm:$0xff]
    %v198 = vld [vmem:[#allocation2 + $0x480] sm:$0xff]
    %v199 = vld [vmem:[#allocation2 + $0x488] sm:$0xff]
    %v200 = vld [vmem:[#allocation2 + $0x490] sm:$0xff]
    %v201 = vld [vmem:[#allocation2 + $0x498] sm:$0xff]
    %v202 = vld [vmem:[#allocation2 + $0x4a0] sm:$0xff]
    %v203 = vld [vmem:[#allocation2 + $0x4a8] sm:$0xff]
    %v204 = vld [vmem:[#allocation2 + $0x4b0] sm:$0xff]
    %v205 = vld [vmem:[#allocation2 + $0x4b8] sm:$0xff]
    %v206 = vld [vmem:[#allocation2 + $0x4c0] sm:$0xff]
    %v207 = vld [vmem:[#allocation2 + $0x4c8] sm:$0xff]
    %v208 = vld [vmem:[#allocation2 + $0x4d0] sm:$0xff]
    %v209 = vld [vmem:[#allocation2 + $0x4d8] sm:$0xff]
    %v210 = vld [vmem:[#allocation2 + $0x4e0] sm:$0xff]
    %v211 = vld [vmem:[#allocation2 + $0x4e8] sm:$0xff]
    %v212 = vld [vmem:[#allocation2 + $0x4f0] sm:$0xff]
    %v213 = vld [vmem:[#allocation2 + $0x4f8] sm:$0xff]
    %v214 = vld [vmem:[#allocation2 + $0x500] sm:$0xff]
    %v215 = vld [vmem:[#allocation2 + $0x508] sm:$0xff]
    %v216 = vld [vmem:[#allocation2 + $0x510] sm:$0xff]
    %v217 = vld [vmem:[#allocation2 + $0x518] sm:$0xff]
    %v218 = vld [vmem:[#allocation2 + $0x520] sm:$0xff]
    %v219 = vld [vmem:[#allocation2 + $0x528] sm:$0xff]
    %v220 = vld [vmem:[#allocation2 + $0x530] sm:$0xff]
    %v221 = vld [vmem:[#allocation2 + $0x538] sm:$0xff]
    %v222 = vld [vmem:[#allocation2 + $0x540] sm:$0xff]
    %v223 = vld [vmem:[#allocation2 + $0x548] sm:$0xff]
    %v224 = vld [vmem:[#allocation2 + $0x550] sm:$0xff]
    %v225 = vld [vmem:[#allocation2 + $0x558] sm:$0xff]
    %v226 = vld [vmem:[#allocation2 + $0x560] sm:$0xff]
    %v227 = vld [vmem:[#allocation2 + $0x568] sm:$0xff]
    %v228 = vld [vmem:[#allocation2 + $0x570] sm:$0xff]
    %v229 = vld [vmem:[#allocation2 + $0x578] sm:$0xff]
    %v230 = vld [vmem:[#allocation2 + $0x580] sm:$0xff]
    %v231 = vld [vmem:[#allocation2 + $0x588] sm:$0xff]
    %v232 = vld [vmem:[#allocation2 + $0x590] sm:$0xff]
    %v233 = vld [vmem:[#allocation2 + $0x598] sm:$0xff]
    %v234 = vld [vmem:[#allocation2 + $0x5a0] sm:$0xff]
    %v235 = vld [vmem:[#allocation2 + $0x5a8] sm:$0xff]
    %v236 = vld [vmem:[#allocation2 + $0x5b0] sm:$0xff]
    %v237 = vld [vmem:[#allocation2 + $0x5b8] sm:$0xff]
    %v238 = vld [vmem:[#allocation2 + $0x5c0] sm:$0xff]
    %v239 = vld [vmem:[#allocation2 + $0x5c8] sm:$0xff]
    %v240 = vld [vmem:[#allocation2 + $0x5d0] sm:$0xff]
    %v241 = vld [vmem:[#allocation2 + $0x5d8] sm:$0xff]
    %v242 = vld [vmem:[#allocation2 + $0x5e0] sm:$0xff]
    %v243 = vld [vmem:[#allocation2 + $0x5e8] sm:$0xff]
    %v244 = vld [vmem:[#allocation2 + $0x5f0] sm:$0xff]
    %v245 = vld [vmem:[#allocation2 + $0x5f8] sm:$0xff]
    %v246 = vld [vmem:[#allocation2 + $0x600] sm:$0xff]
    %v247 = vld [vmem:[#allocation2 + $0x608] sm:$0xff]
    %v248 = vld [vmem:[#allocation2 + $0x610] sm:$0xff]
    %v249 = vld [vmem:[#allocation2 + $0x618] sm:$0xff]
    %v250 = vld [vmem:[#allocation2 + $0x620] sm:$0xff]
    %v251 = vld [vmem:[#allocation2 + $0x628] sm:$0xff]
    %v252 = vld [vmem:[#allocation2 + $0x630] sm:$0xff]
    %v253 = vld [vmem:[#allocation2 + $0x638] sm:$0xff]
    %v254 = vld [vmem:[#allocation2 + $0x640] sm:$0xff]
    %v255 = vld [vmem:[#allocation2 + $0x648] sm:$0xff]
    %v256 = vld [vmem:[#allocation2 + $0x650] sm:$0xff]
    %v257 = vld [vmem:[#allocation2 + $0x658] sm:$0xff]
    %v258 = vld [vmem:[#allocation2 + $0x660] sm:$0xff]
    %v259 = vld [vmem:[#allocation2 + $0x668] sm:$0xff]
    %v260 = vld [vmem:[#allocation2 + $0x670] sm:$0xff]
    %v261 = vld [vmem:[#allocation2 + $0x678] sm:$0xff]
    %v262 = vld [vmem:[#allocation2 + $0x680] sm:$0xff]
    %v263 = vld [vmem:[#allocation2 + $0x688] sm:$0xff]
    %v264 = vld [vmem:[#allocation2 + $0x690] sm:$0xff]
    %v265 = vld [vmem:[#allocation2 + $0x698] sm:$0xff]
    %v266 = vld [vmem:[#allocation2 + $0x6a0] sm:$0xff]
    %v267 = vld [vmem:[#allocation2 + $0x6a8] sm:$0xff]
    %v268 = vld [vmem:[#allocation2 + $0x6b0] sm:$0xff]
    %v269 = vld [vmem:[#allocation2 + $0x6b8] sm:$0xff]
    %v270 = vld [vmem:[#allocation2 + $0x6c0] sm:$0xff]
    %v271 = vld [vmem:[#allocation2 + $0x6c8] sm:$0xff]
    %v272 = vld [vmem:[#allocation2 + $0x6d0] sm:$0xff]
    %v273 = vld [vmem:[#allocation2 + $0x6d8] sm:$0xff]
    %v274 = vld [vmem:[#allocation2 + $0x6e0] sm:$0xff]
    %v275 = vld [vmem:[#allocation2 + $0x6e8] sm:$0xff]
    %v276 = vld [vmem:[#allocation2 + $0x6f0] sm:$0xff]
    %v277 = vld [vmem:[#allocation2 + $0x6f8] sm:$0xff]
    %v278 = vld [vmem:[#allocation2 + $0x700] sm:$0xff]
    %v279 = vld [vmem:[#allocation2 + $0x708] sm:$0xff]
    %v280 = vld [vmem:[#allocation2 + $0x710] sm:$0xff]
    %v281 = vld [vmem:[#allocation2 + $0x718] sm:$0xff]
    %v282 = vld [vmem:[#allocation2 + $0x720] sm:$0xff]
    %v283 = vld [vmem:[#allocation2 + $0x728] sm:$0xff]
    %v284 = vld [vmem:[#allocation2 + $0x730] sm:$0xff]
    %v285 = vld [vmem:[#allocation2 + $0x738] sm:$0xff]
    %v286 = vld [vmem:[#allocation2 + $0x740] sm:$0xff]
    %v287 = vld [vmem:[#allocation2 + $0x748] sm:$0xff]
    %v288 = vld [vmem:[#allocation2 + $0x750] sm:$0xff]
    %v289 = vld [vmem:[#allocation2 + $0x758] sm:$0xff]
    %v290 = vld [vmem:[#allocation2 + $0x760] sm:$0xff]
    %v291 = vld [vmem:[#allocation2 + $0x768] sm:$0xff]
    %v292 = vld [vmem:[#allocation2 + $0x770] sm:$0xff]
    %v293 = vld [vmem:[#allocation2 + $0x778] sm:$0xff]
    %v294 = vld [vmem:[#allocation2 + $0x780] sm:$0xff]
    %v295 = vld [vmem:[#allocation2 + $0x788] sm:$0xff]
    %v296 = vld [vmem:[#allocation2 + $0x790] sm:$0xff]
    %v297 = vld [vmem:[#allocation2 + $0x798] sm:$0xff]
    %v298 = vld [vmem:[#allocation2 + $0x7a0] sm:$0xff]
    %v299 = vld [vmem:[#allocation2 + $0x7a8] sm:$0xff]
    %v300 = vld [vmem:[#allocation2 + $0x7b0] sm:$0xff]
    %v301 = vld [vmem:[#allocation2 + $0x7b8] sm:$0xff]
    %v302 = vld [vmem:[#allocation2 + $0x7c0] sm:$0xff]
    %v303 = vld [vmem:[#allocation2 + $0x7c8] sm:$0xff]
    %v304 = vld [vmem:[#allocation2 + $0x7d0] sm:$0xff]
    %v305 = vld [vmem:[#allocation2 + $0x7d8] sm:$0xff]
    %v306 = vld [vmem:[#allocation2 + $0x7e0] sm:$0xff]
    %v307 = vld [vmem:[#allocation2 + $0x7e8] sm:$0xff]
    %v308 = vld [vmem:[#allocation2 + $0x7f0] sm:$0xff]
    %v309 = vld [vmem:[#allocation2 + $0x7f8] sm:$0xff]
    %v310 = vld [vmem:[#allocation2 + $0x800] sm:$0xff]
    %v311 = vld [vmem:[#allocation2 + $0x808] sm:$0xff]
    %v312 = vld [vmem:[#allocation2 + $0x810] sm:$0xff]
    %v313 = vld [vmem:[#allocation2 + $0x818] sm:$0xff]
    %v314 = vld [vmem:[#allocation2 + $0x820] sm:$0xff]
    %v315 = vld [vmem:[#allocation2 + $0x828] sm:$0xff]
    %v316 = vld [vmem:[#allocation2 + $0x830] sm:$0xff]
    %v317 = vld [vmem:[#allocation2 + $0x838] sm:$0xff]
    %v318 = vld [vmem:[#allocation2 + $0x840] sm:$0xff]
    %v319 = vld [vmem:[#allocation2 + $0x848] sm:$0xff]
    %v320 = vld [vmem:[#allocation2 + $0x850] sm:$0xff]
    %v321 = vld [vmem:[#allocation2 + $0x858] sm:$0xff]
    %v322 = vld [vmem:[#allocation2 + $0x860] sm:$0xff]
    %v323 = vld [vmem:[#allocation2 + $0x868] sm:$0xff]
    %v324 = vld [vmem:[#allocation2 + $0x870] sm:$0xff]
    %v325 = vld [vmem:[#allocation2 + $0x878] sm:$0xff]
    %v326 = vld [vmem:[#allocation2 + $0x880] sm:$0xff]
    %v327 = vld [vmem:[#allocation2 + $0x888] sm:$0xff]
    %v328 = vld [vmem:[#allocation2 + $0x890] sm:$0xff]
    %v329 = vld [vmem:[#allocation2 + $0x898] sm:$0xff]
    %v330 = vld [vmem:[#allocation2 + $0x8a0] sm:$0xff]
    %v331 = vld [vmem:[#allocation2 + $0x8a8] sm:$0xff]
    %v332 = vld [vmem:[#allocation2 + $0x8b0] sm:$0xff]
    %v333 = vld [vmem:[#allocation2 + $0x8b8] sm:$0xff]
    %v334 = vld [vmem:[#allocation2 + $0x8c0] sm:$0xff]
    %v335 = vld [vmem:[#allocation2 + $0x8c8] sm:$0xff]
    %v336 = vld [vmem:[#allocation2 + $0x8d0] sm:$0xff]
    %v337 = vld [vmem:[#allocation2 + $0x8d8] sm:$0xff]
    %v338 = vld [vmem:[#allocation2 + $0x8e0] sm:$0xff]
    %v339 = vld [vmem:[#allocation2 + $0x8e8] sm:$0xff]
    %v340 = vld [vmem:[#allocation2 + $0x8f0] sm:$0xff]
    %v341 = vld [vmem:[#allocation2 + $0x8f8] sm:$0xff]
    %v342 = vld [vmem:[#allocation2 + $0x900] sm:$0xff]
    %v343 = vld [vmem:[#allocation2 + $0x908] sm:$0xff]
    %v344 = vld [vmem:[#allocation2 + $0x910] sm:$0xff]
    %v345 = vld [vmem:[#allocation2 + $0x918] sm:$0xff]
    %v346 = vld [vmem:[#allocation2 + $0x920] sm:$0xff]
    %v347 = vld [vmem:[#allocation2 + $0x928] sm:$0xff]
    %v348 = vld [vmem:[#allocation2 + $0x930] sm:$0xff]
    %v349 = vld [vmem:[#allocation2 + $0x938] sm:$0xff]
    %v350 = vld [vmem:[#allocation2 + $0x940] sm:$0xff]
    %v351 = vld [vmem:[#allocation2 + $0x948] sm:$0xff]
    %v352 = vld [vmem:[#allocation2 + $0x950] sm:$0xff]
    %v353 = vld [vmem:[#allocation2 + $0x958] sm:$0xff]
    %v354 = vld [vmem:[#allocation2 + $0x960] sm:$0xff]
    %v355 = vld [vmem:[#allocation2 + $0x968] sm:$0xff]
    %v356 = vld [vmem:[#allocation2 + $0x970] sm:$0xff]
    %v357 = vld [vmem:[#allocation2 + $0x978] sm:$0xff]
    %v358 = vld [vmem:[#allocation2 + $0x980] sm:$0xff]
    %v359 = vld [vmem:[#allocation2 + $0x988] sm:$0xff]
    %v360 = vld [vmem:[#allocation2 + $0x990] sm:$0xff]
    %v361 = vld [vmem:[#allocation2 + $0x998] sm:$0xff]
    %v362 = vld [vmem:[#allocation2 + $0x9a0] sm:$0xff]
    %v363 = vld [vmem:[#allocation2 + $0x9a8] sm:$0xff]
    %v364 = vld [vmem:[#allocation2 + $0x9b0] sm:$0xff]
    %v365 = vld [vmem:[#allocation2 + $0x9b8] sm:$0xff]
    %v366 = vld [vmem:[#allocation2 + $0x9c0] sm:$0xff]
    %v367 = vld [vmem:[#allocation2 + $0x9c8] sm:$0xff]
    %v368 = vld [vmem:[#allocation2 + $0x9d0] sm:$0xff]
    %v369 = vld [vmem:[#allocation2 + $0x9d8] sm:$0xff]
    %v370 = vld [vmem:[#allocation2 + $0x9e0] sm:$0xff]
    %v371 = vld [vmem:[#allocation2 + $0x9e8] sm:$0xff]
    %v372 = vld [vmem:[#allocation2 + $0x9f0] sm:$0xff]
    %v373 = vld [vmem:[#allocation2 + $0x9f8] sm:$0xff]
    %v374 = vld [vmem:[#allocation2 + $0xa00] sm:$0xff]
    %v375 = vld [vmem:[#allocation2 + $0xa08] sm:$0xff]
    %v376 = vld [vmem:[#allocation2 + $0xa10] sm:$0xff]
    %v377 = vld [vmem:[#allocation2 + $0xa18] sm:$0xff]
    %v378 = vld [vmem:[#allocation2 + $0xa20] sm:$0xff]
    %v379 = vld [vmem:[#allocation2 + $0xa28] sm:$0xff]
    %v380 = vld [vmem:[#allocation2 + $0xa30] sm:$0xff]
    %v381 = vld [vmem:[#allocation2 + $0xa38] sm:$0xff]
    %v382 = vld [vmem:[#allocation2 + $0xa40] sm:$0xff]
    %v383 = vld [vmem:[#allocation2 + $0xa48] sm:$0xff]
    %v384 = vld [vmem:[#allocation2 + $0xa50] sm:$0xff]
    %v385 = vld [vmem:[#allocation2 + $0xa58] sm:$0xff]
    %v386 = vld [vmem:[#allocation2 + $0xa60] sm:$0xff]
    %v387 = vld [vmem:[#allocation2 + $0xa68] sm:$0xff]
    %v388 = vld [vmem:[#allocation2 + $0xa70] sm:$0xff]
    %v389 = vld [vmem:[#allocation2 + $0xa78] sm:$0xff]
    %v390 = vld [vmem:[#allocation2 + $0xa80] sm:$0xff]
    %v391 = vld [vmem:[#allocation2 + $0xa88] sm:$0xff]
    %v392 = vld [vmem:[#allocation2 + $0xa90] sm:$0xff]
    %v393 = vld [vmem:[#allocation2 + $0xa98] sm:$0xff]
    %v394 = vld [vmem:[#allocation2 + $0xaa0] sm:$0xff]
    %v395 = vld [vmem:[#allocation2 + $0xaa8] sm:$0xff]
    %v396 = vld [vmem:[#allocation2 + $0xab0] sm:$0xff]
    %v397 = vld [vmem:[#allocation2 + $0xab8] sm:$0xff]
    %v398 = vld [vmem:[#allocation2 + $0xac0] sm:$0xff]
    %v399 = vld [vmem:[#allocation2 + $0xac8] sm:$0xff]
    %v400 = vld [vmem:[#allocation2 + $0xad0] sm:$0xff]
    %v401 = vld [vmem:[#allocation2 + $0xad8] sm:$0xff]
    %v402 = vld [vmem:[#allocation2 + $0xae0] sm:$0xff]
    %v403 = vld [vmem:[#allocation2 + $0xae8] sm:$0xff]
    %v404 = vld [vmem:[#allocation2 + $0xaf0] sm:$0xff]
    %v405 = vld [vmem:[#allocation2 + $0xaf8] sm:$0xff]
    %v406 = vld [vmem:[#allocation2 + $0xb00] sm:$0xff]
    %v407 = vld [vmem:[#allocation2 + $0xb08] sm:$0xff]
    %v408 = vld [vmem:[#allocation2 + $0xb10] sm:$0xff]
    %v409 = vld [vmem:[#allocation2 + $0xb18] sm:$0xff]
    %v410 = vld [vmem:[#allocation2 + $0xb20] sm:$0xff]
    %v411 = vld [vmem:[#allocation2 + $0xb28] sm:$0xff]
    %v412 = vld [vmem:[#allocation2 + $0xb30] sm:$0xff]
    %v413 = vld [vmem:[#allocation2 + $0xb38] sm:$0xff]
    %v414 = vld [vmem:[#allocation2 + $0xb40] sm:$0xff]
    %v415 = vld [vmem:[#allocation2 + $0xb48] sm:$0xff]
    %v416 = vld [vmem:[#allocation2 + $0xb50] sm:$0xff]
    %v417 = vld [vmem:[#allocation2 + $0xb58] sm:$0xff]
    %v418 = vld [vmem:[#allocation2 + $0xb60] sm:$0xff]
    %v419 = vld [vmem:[#allocation2 + $0xb68] sm:$0xff]
    %v420 = vld [vmem:[#allocation2 + $0xb70] sm:$0xff]
    %v421 = vld [vmem:[#allocation2 + $0xb78] sm:$0xff]
    %v422 = vld [vmem:[#allocation2 + $0xb80] sm:$0xff]
    %v423 = vld [vmem:[#allocation2 + $0xb88] sm:$0xff]
    %v424 = vld [vmem:[#allocation2 + $0xb90] sm:$0xff]
    %v425 = vld [vmem:[#allocation2 + $0xb98] sm:$0xff]
    %v426 = vld [vmem:[#allocation2 + $0xba0] sm:$0xff]
    %v427 = vld [vmem:[#allocation2 + $0xba8] sm:$0xff]
    %v428 = vld [vmem:[#allocation2 + $0xbb0] sm:$0xff]
    %v429 = vld [vmem:[#allocation2 + $0xbb8] sm:$0xff]
    %v430 = vld [vmem:[#allocation2 + $0xbc0] sm:$0xff]
    %v431 = vld [vmem:[#allocation2 + $0xbc8] sm:$0xff]
    %v432 = vld [vmem:[#allocation2 + $0xbd0] sm:$0xff]
    %v433 = vld [vmem:[#allocation2 + $0xbd8] sm:$0xff]
    %v434 = vld [vmem:[#allocation2 + $0xbe0] sm:$0xff]
    %v435 = vld [vmem:[#allocation2 + $0xbe8] sm:$0xff]
    %v436 = vld [vmem:[#allocation2 + $0xbf0] sm:$0xff]
    %v437 = vld [vmem:[#allocation2 + $0xbf8] sm:$0xff]
    %v438 = vld [vmem:[#allocation2 + $0xc00] sm:$0xff]
    %v439 = vld [vmem:[#allocation2 + $0xc08] sm:$0xff]
    %v440 = vld [vmem:[#allocation2 + $0xc10] sm:$0xff]
    %v441 = vld [vmem:[#allocation2 + $0xc18] sm:$0xff]
    %v442 = vld [vmem:[#allocation2 + $0xc20] sm:$0xff]
    %v443 = vld [vmem:[#allocation2 + $0xc28] sm:$0xff]
    %v444 = vld [vmem:[#allocation2 + $0xc30] sm:$0xff]
    %v445 = vld [vmem:[#allocation2 + $0xc38] sm:$0xff]
    %v446 = vld [vmem:[#allocation2 + $0xc40] sm:$0xff]
    %v447 = vld [vmem:[#allocation2 + $0xc48] sm:$0xff]
    %v448 = vld [vmem:[#allocation2 + $0xc50] sm:$0xff]
    %v449 = vld [vmem:[#allocation2 + $0xc58] sm:$0xff]
    %v450 = vld [vmem:[#allocation2 + $0xc60] sm:$0xff]
    %v451 = vld [vmem:[#allocation2 + $0xc68] sm:$0xff]
    %v452 = vld [vmem:[#allocation2 + $0xc70] sm:$0xff]
    %v453 = vld [vmem:[#allocation2 + $0xc78] sm:$0xff]
    %v454 = vld [vmem:[#allocation2 + $0xc80] sm:$0xff]
    %v455 = vld [vmem:[#allocation2 + $0xc88] sm:$0xff]
    %v456 = vld [vmem:[#allocation2 + $0xc90] sm:$0xff]
    %v457 = vld [vmem:[#allocation2 + $0xc98] sm:$0xff]
    %v458 = vld [vmem:[#allocation2 + $0xca0] sm:$0xff]
    %v459 = vld [vmem:[#allocation2 + $0xca8] sm:$0xff]
    %v460 = vld [vmem:[#allocation2 + $0xcb0] sm:$0xff]
    %v461 = vld [vmem:[#allocation2 + $0xcb8] sm:$0xff]
    %v462 = vld [vmem:[#allocation2 + $0xcc0] sm:$0xff]
    %v463 = vld [vmem:[#allocation2 + $0xcc8] sm:$0xff]
    %v464 = vld [vmem:[#allocation2 + $0xcd0] sm:$0xff]
    %v465 = vld [vmem:[#allocation2 + $0xcd8] sm:$0xff]
    %v466 = vld [vmem:[#allocation2 + $0xce0] sm:$0xff]
    %v467 = vld [vmem:[#allocation2 + $0xce8] sm:$0xff]
    %v468 = vld [vmem:[#allocation2 + $0xcf0] sm:$0xff]
    %v469 = vld [vmem:[#allocation2 + $0xcf8] sm:$0xff]
    %v470 = vld [vmem:[#allocation2 + $0xd00] sm:$0xff]
    %v471 = vld [vmem:[#allocation2 + $0xd08] sm:$0xff]
    %v472 = vld [vmem:[#allocation2 + $0xd10] sm:$0xff]
    %v473 = vld [vmem:[#allocation2 + $0xd18] sm:$0xff]
    %v474 = vld [vmem:[#allocation2 + $0xd20] sm:$0xff]
    %v475 = vld [vmem:[#allocation2 + $0xd28] sm:$0xff]
    %v476 = vld [vmem:[#allocation2 + $0xd30] sm:$0xff]
    %v477 = vld [vmem:[#allocation2 + $0xd38] sm:$0xff]
    %v478 = vld [vmem:[#allocation2 + $0xd40] sm:$0xff]
    %v479 = vld [vmem:[#allocation2 + $0xd48] sm:$0xff]
    %v480 = vld [vmem:[#allocation2 + $0xd50] sm:$0xff]
    %v481 = vld [vmem:[#allocation2 + $0xd58] sm:$0xff]
    %v482 = vld [vmem:[#allocation2 + $0xd60] sm:$0xff]
    %v483 = vld [vmem:[#allocation2 + $0xd68] sm:$0xff]
    %v484 = vld [vmem:[#allocation2 + $0xd70] sm:$0xff]
    %v485 = vld [vmem:[#allocation2 + $0xd78] sm:$0xff]
    %v486 = vld [vmem:[#allocation2 + $0xd80] sm:$0xff]
    %v487 = vld [vmem:[#allocation2 + $0xd88] sm:$0xff]
    %v488 = vld [vmem:[#allocation2 + $0xd90] sm:$0xff]
    %v489 = vld [vmem:[#allocation2 + $0xd98] sm:$0xff]
    %v490 = vld [vmem:[#allocation2 + $0xda0] sm:$0xff]
    %v491 = vld [vmem:[#allocation2 + $0xda8] sm:$0xff]
    %v492 = vld [vmem:[#allocation2 + $0xdb0] sm:$0xff]
    %v493 = vld [vmem:[#allocation2 + $0xdb8] sm:$0xff]
    %v494 = vld [vmem:[#allocation2 + $0xdc0] sm:$0xff]
    %v495 = vld [vmem:[#allocation2 + $0xdc8] sm:$0xff]
    %v496 = vld [vmem:[#allocation2 + $0xdd0] sm:$0xff]
    %v497 = vld [vmem:[#allocation2 + $0xdd8] sm:$0xff]
    %v498 = vld [vmem:[#allocation2 + $0xde0] sm:$0xff]
    %v499 = vld [vmem:[#allocation2 + $0xde8] sm:$0xff]
    %v500 = vld [vmem:[#allocation2 + $0xdf0] sm:$0xff]
    %v501 = vld [vmem:[#allocation2 + $0xdf8] sm:$0xff]
    %v502 = vld [vmem:[#allocation2 + $0xe00] sm:$0xff]
    %v503 = vld [vmem:[#allocation2 + $0xe08] sm:$0xff]
    %v504 = vld [vmem:[#allocation2 + $0xe10] sm:$0xff]
    %v505 = vld [vmem:[#allocation2 + $0xe18] sm:$0xff]
    %v506 = vld [vmem:[#allocation2 + $0xe20] sm:$0xff]
    %v507 = vld [vmem:[#allocation2 + $0xe28] sm:$0xff]
    %v508 = vld [vmem:[#allocation2 + $0xe30] sm:$0xff]
    %v509 = vld [vmem:[#allocation2 + $0xe38] sm:$0xff]
    %v510 = vld [vmem:[#allocation2 + $0xe40] sm:$0xff]
    %v511 = vld [vmem:[#allocation2 + $0xe48] sm:$0xff]
    %v512 = vld [vmem:[#allocation2 + $0xe50] sm:$0xff]
    %v513 = vld [vmem:[#allocation2 + $0xe58] sm:$0xff]
    %v514 = vld [vmem:[#allocation2 + $0xe60] sm:$0xff]
    %v515 = vld [vmem:[#allocation2 + $0xe68] sm:$0xff]
    %v516 = vld [vmem:[#allocation2 + $0xe70] sm:$0xff]
    %v517 = vld [vmem:[#allocation2 + $0xe78] sm:$0xff]
    %v518 = vld [vmem:[#allocation2 + $0xe80] sm:$0xff]
    %v519 = vld [vmem:[#allocation2 + $0xe88] sm:$0xff]
    %v520 = vld [vmem:[#allocation2 + $0xe90] sm:$0xff]
    %v521 = vld [vmem:[#allocation2 + $0xe98] sm:$0xff]
    %v522 = vld [vmem:[#allocation2 + $0xea0] sm:$0xff]
    %v523 = vld [vmem:[#allocation2 + $0xea8] sm:$0xff]
    %v524 = vld [vmem:[#allocation2 + $0xeb0] sm:$0xff]
    %v525 = vld [vmem:[#allocation2 + $0xeb8] sm:$0xff]
    %v526 = vld [vmem:[#allocation2 + $0xec0] sm:$0xff]
    %v527 = vld [vmem:[#allocation2 + $0xec8] sm:$0xff]
    %v528 = vld [vmem:[#allocation2 + $0xed0] sm:$0xff]
    %v529 = vld [vmem:[#allocation2 + $0xed8] sm:$0xff]
    %v530 = vld [vmem:[#allocation2 + $0xee0] sm:$0xff]
    %v531 = vld [vmem:[#allocation2 + $0xee8] sm:$0xff]
    %v532 = vld [vmem:[#allocation2 + $0xef0] sm:$0xff]
    %v533 = vld [vmem:[#allocation2 + $0xef8] sm:$0xff]
    %v534 = vld [vmem:[#allocation2 + $0xf00] sm:$0xff]
    %v535 = vld [vmem:[#allocation2 + $0xf08] sm:$0xff]
    %v536 = vld [vmem:[#allocation2 + $0xf10] sm:$0xff]
    %v537 = vld [vmem:[#allocation2 + $0xf18] sm:$0xff]
    %v538 = vld [vmem:[#allocation2 + $0xf20] sm:$0xff]
    %v539 = vld [vmem:[#allocation2 + $0xf28] sm:$0xff]
    %v540 = vld [vmem:[#allocation2 + $0xf30] sm:$0xff]
    %v541 = vld [vmem:[#allocation2 + $0xf38] sm:$0xff]
    %v542 = vld [vmem:[#allocation2 + $0xf40] sm:$0xff]
    %v543 = vld [vmem:[#allocation2 + $0xf48] sm:$0xff]
    %v544 = vld [vmem:[#allocation2 + $0xf50] sm:$0xff]
    %v545 = vld [vmem:[#allocation2 + $0xf58] sm:$0xff]
    %v546 = vld [vmem:[#allocation2 + $0xf60] sm:$0xff]
    %v547 = vld [vmem:[#allocation2 + $0xf68] sm:$0xff]
    %v548 = vld [vmem:[#allocation2 + $0xf70] sm:$0xff]
    %v549 = vld [vmem:[#allocation2 + $0xf78] sm:$0xff]
    %v550 = vld [vmem:[#allocation2 + $0xf80] sm:$0xff]
    %v551 = vld [vmem:[#allocation2 + $0xf88] sm:$0xff]
    %v552 = vld [vmem:[#allocation2 + $0xf90] sm:$0xff]
    %v553 = vld [vmem:[#allocation2 + $0xf98] sm:$0xff]
    %v554 = vld [vmem:[#allocation2 + $0xfa0] sm:$0xff]
    %v555 = vld [vmem:[#allocation2 + $0xfa8] sm:$0xff]
    %v556 = vld [vmem:[#allocation2 + $0xfb0] sm:$0xff]
    %v557 = vld [vmem:[#allocation2 + $0xfb8] sm:$0xff]
    %v558 = vld [vmem:[#allocation2 + $0xfc0] sm:$0xff]
    %v559 = vld [vmem:[#allocation2 + $0xfc8] sm:$0xff]
    %v560 = vld [vmem:[#allocation2 + $0xfd0] sm:$0xff]
    %v561 = vld [vmem:[#allocation2 + $0xfd8] sm:$0xff]
    %v562 = vld [vmem:[#allocation2 + $0xfe0] sm:$0xff]
    %v563 = vld [vmem:[#allocation2 + $0xfe8] sm:$0xff]
    %v564 = vld [vmem:[#allocation2 + $0xff0] sm:$0xff]
    %v565 = vld [vmem:[#allocation2 + $0xff8] sm:$0xff]
    %v566 = vpack.c.bf16 %v62, %v54
    %v567 = vpack.c.bf16 %v63, %v55
    %v568 = vpack.c.bf16 %v64, %v56
    %v569 = vpack.c.bf16 %v65, %v57
    %v570 = vpack.c.bf16 %v66, %v58
    %v571 = vpack.c.bf16 %v67, %v59
    %v572 = vpack.c.bf16 %v68, %v60
    %v573 = vpack.c.bf16 %v69, %v61
    %v574 = vpack.c.bf16 %v78, %v70
    %v575 = vpack.c.bf16 %v79, %v71
    %v576 = vpack.c.bf16 %v80, %v72
    %v577 = vpack.c.bf16 %v81, %v73
    %v578 = vpack.c.bf16 %v82, %v74
    %v579 = vpack.c.bf16 %v83, %v75
    %v580 = vpack.c.bf16 %v84, %v76
    %v581 = vpack.c.bf16 %v85, %v77
    %v582 = vpack.c.bf16 %v94, %v86
    %v583 = vpack.c.bf16 %v95, %v87
    %v584 = vpack.c.bf16 %v96, %v88
    %v585 = vpack.c.bf16 %v97, %v89
    %v586 = vpack.c.bf16 %v98, %v90
    %v587 = vpack.c.bf16 %v99, %v91
    %v588 = vpack.c.bf16 %v100, %v92
    %v589 = vpack.c.bf16 %v101, %v93
    %v590 = vpack.c.bf16 %v110, %v102
    %v591 = vpack.c.bf16 %v111, %v103
    %v592 = vpack.c.bf16 %v112, %v104
    %v593 = vpack.c.bf16 %v113, %v105
    %v594 = vpack.c.bf16 %v114, %v106
    %v595 = vpack.c.bf16 %v115, %v107
    %v596 = vpack.c.bf16 %v116, %v108
    %v597 = vpack.c.bf16 %v117, %v109
    %v598 = vpack.c.bf16 %v126, %v118
    %v599 = vpack.c.bf16 %v127, %v119
    %v600 = vpack.c.bf16 %v128, %v120
    %v601 = vpack.c.bf16 %v129, %v121
    %v602 = vpack.c.bf16 %v130, %v122
    %v603 = vpack.c.bf16 %v131, %v123
    %v604 = vpack.c.bf16 %v132, %v124
    %v605 = vpack.c.bf16 %v133, %v125
    %v606 = vpack.c.bf16 %v142, %v134
    %v607 = vpack.c.bf16 %v143, %v135
    %v608 = vpack.c.bf16 %v144, %v136
    %v609 = vpack.c.bf16 %v145, %v137
    %v610 = vpack.c.bf16 %v146, %v138
    %v611 = vpack.c.bf16 %v147, %v139
    %v612 = vpack.c.bf16 %v148, %v140
    %v613 = vpack.c.bf16 %v149, %v141
    %v614 = vpack.c.bf16 %v158, %v150
    %v615 = vpack.c.bf16 %v159, %v151
    %v616 = vpack.c.bf16 %v160, %v152
    %v617 = vpack.c.bf16 %v161, %v153
    %v618 = vpack.c.bf16 %v162, %v154
    %v619 = vpack.c.bf16 %v163, %v155
    %v620 = vpack.c.bf16 %v164, %v156
    %v621 = vpack.c.bf16 %v165, %v157
    %v622 = vpack.c.bf16 %v174, %v166
    %v623 = vpack.c.bf16 %v175, %v167
    %v624 = vpack.c.bf16 %v176, %v168
    %v625 = vpack.c.bf16 %v177, %v169
    %v626 = vpack.c.bf16 %v178, %v170
    %v627 = vpack.c.bf16 %v179, %v171
    %v628 = vpack.c.bf16 %v180, %v172
    %v629 = vpack.c.bf16 %v181, %v173
    %v630 = vpack.c.bf16 %v190, %v182
    %v631 = vpack.c.bf16 %v191, %v183
    %v632 = vpack.c.bf16 %v192, %v184
    %v633 = vpack.c.bf16 %v193, %v185
    %v634 = vpack.c.bf16 %v194, %v186
    %v635 = vpack.c.bf16 %v195, %v187
    %v636 = vpack.c.bf16 %v196, %v188
    %v637 = vpack.c.bf16 %v197, %v189
    %v638 = vpack.c.bf16 %v206, %v198
    %v639 = vpack.c.bf16 %v207, %v199
    %v640 = vpack.c.bf16 %v208, %v200
    %v641 = vpack.c.bf16 %v209, %v201
    %v642 = vpack.c.bf16 %v210, %v202
    %v643 = vpack.c.bf16 %v211, %v203
    %v644 = vpack.c.bf16 %v212, %v204
    %v645 = vpack.c.bf16 %v213, %v205
    %v646 = vpack.c.bf16 %v222, %v214
    %v647 = vpack.c.bf16 %v223, %v215
    %v648 = vpack.c.bf16 %v224, %v216
    %v649 = vpack.c.bf16 %v225, %v217
    %v650 = vpack.c.bf16 %v226, %v218
    %v651 = vpack.c.bf16 %v227, %v219
    %v652 = vpack.c.bf16 %v228, %v220
    %v653 = vpack.c.bf16 %v229, %v221
    %v654 = vpack.c.bf16 %v238, %v230
    %v655 = vpack.c.bf16 %v239, %v231
    %v656 = vpack.c.bf16 %v240, %v232
    %v657 = vpack.c.bf16 %v241, %v233
    %v658 = vpack.c.bf16 %v242, %v234
    %v659 = vpack.c.bf16 %v243, %v235
    %v660 = vpack.c.bf16 %v244, %v236
    %v661 = vpack.c.bf16 %v245, %v237
    %v662 = vpack.c.bf16 %v254, %v246
    %v663 = vpack.c.bf16 %v255, %v247
    %v664 = vpack.c.bf16 %v256, %v248
    %v665 = vpack.c.bf16 %v257, %v249
    %v666 = vpack.c.bf16 %v258, %v250
    %v667 = vpack.c.bf16 %v259, %v251
    %v668 = vpack.c.bf16 %v260, %v252
    %v669 = vpack.c.bf16 %v261, %v253
    %v670 = vpack.c.bf16 %v270, %v262
    %v671 = vpack.c.bf16 %v271, %v263
    %v672 = vpack.c.bf16 %v272, %v264
    %v673 = vpack.c.bf16 %v273, %v265
    %v674 = vpack.c.bf16 %v274, %v266
    %v675 = vpack.c.bf16 %v275, %v267
    %v676 = vpack.c.bf16 %v276, %v268
    %v677 = vpack.c.bf16 %v277, %v269
    %v678 = vpack.c.bf16 %v286, %v278
    %v679 = vpack.c.bf16 %v287, %v279
    %v680 = vpack.c.bf16 %v288, %v280
    %v681 = vpack.c.bf16 %v289, %v281
    %v682 = vpack.c.bf16 %v290, %v282
    %v683 = vpack.c.bf16 %v291, %v283
    %v684 = vpack.c.bf16 %v292, %v284
    %v685 = vpack.c.bf16 %v293, %v285
    %v686 = vpack.c.bf16 %v302, %v294
    %v687 = vpack.c.bf16 %v303, %v295
    %v688 = vpack.c.bf16 %v304, %v296
    %v689 = vpack.c.bf16 %v305, %v297
    %v690 = vpack.c.bf16 %v306, %v298
    %v691 = vpack.c.bf16 %v307, %v299
    %v692 = vpack.c.bf16 %v308, %v300
    %v693 = vpack.c.bf16 %v309, %v301
    %v694 = vpack.c.bf16 %v318, %v310
    %v695 = vpack.c.bf16 %v319, %v311
    %v696 = vpack.c.bf16 %v320, %v312
    %v697 = vpack.c.bf16 %v321, %v313
    %v698 = vpack.c.bf16 %v322, %v314
    %v699 = vpack.c.bf16 %v323, %v315
    %v700 = vpack.c.bf16 %v324, %v316
    %v701 = vpack.c.bf16 %v325, %v317
    %v702 = vpack.c.bf16 %v334, %v326
    %v703 = vpack.c.bf16 %v335, %v327
    %v704 = vpack.c.bf16 %v336, %v328
    %v705 = vpack.c.bf16 %v337, %v329
    %v706 = vpack.c.bf16 %v338, %v330
    %v707 = vpack.c.bf16 %v339, %v331
    %v708 = vpack.c.bf16 %v340, %v332
    %v709 = vpack.c.bf16 %v341, %v333
    %v710 = vpack.c.bf16 %v350, %v342
    %v711 = vpack.c.bf16 %v351, %v343
    %v712 = vpack.c.bf16 %v352, %v344
    %v713 = vpack.c.bf16 %v353, %v345
    %v714 = vpack.c.bf16 %v354, %v346
    %v715 = vpack.c.bf16 %v355, %v347
    %v716 = vpack.c.bf16 %v356, %v348
    %v717 = vpack.c.bf16 %v357, %v349
    %v718 = vpack.c.bf16 %v366, %v358
    %v719 = vpack.c.bf16 %v367, %v359
    %v720 = vpack.c.bf16 %v368, %v360
    %v721 = vpack.c.bf16 %v369, %v361
    %v722 = vpack.c.bf16 %v370, %v362
    %v723 = vpack.c.bf16 %v371, %v363
    %v724 = vpack.c.bf16 %v372, %v364
    %v725 = vpack.c.bf16 %v373, %v365
    %v726 = vpack.c.bf16 %v382, %v374
    %v727 = vpack.c.bf16 %v383, %v375
    %v728 = vpack.c.bf16 %v384, %v376
    %v729 = vpack.c.bf16 %v385, %v377
    %v730 = vpack.c.bf16 %v386, %v378
    %v731 = vpack.c.bf16 %v387, %v379
    %v732 = vpack.c.bf16 %v388, %v380
    %v733 = vpack.c.bf16 %v389, %v381
    %v734 = vpack.c.bf16 %v398, %v390
    %v735 = vpack.c.bf16 %v399, %v391
    %v736 = vpack.c.bf16 %v400, %v392
    %v737 = vpack.c.bf16 %v401, %v393
    %v738 = vpack.c.bf16 %v402, %v394
    %v739 = vpack.c.bf16 %v403, %v395
    %v740 = vpack.c.bf16 %v404, %v396
    %v741 = vpack.c.bf16 %v405, %v397
    %v742 = vpack.c.bf16 %v414, %v406
    %v743 = vpack.c.bf16 %v415, %v407
    %v744 = vpack.c.bf16 %v416, %v408
    %v745 = vpack.c.bf16 %v417, %v409
    %v746 = vpack.c.bf16 %v418, %v410
    %v747 = vpack.c.bf16 %v419, %v411
    %v748 = vpack.c.bf16 %v420, %v412
    %v749 = vpack.c.bf16 %v421, %v413
    %v750 = vpack.c.bf16 %v430, %v422
    %v751 = vpack.c.bf16 %v431, %v423
    %v752 = vpack.c.bf16 %v432, %v424
    %v753 = vpack.c.bf16 %v433, %v425
    %v754 = vpack.c.bf16 %v434, %v426
    %v755 = vpack.c.bf16 %v435, %v427
    %v756 = vpack.c.bf16 %v436, %v428
    %v757 = vpack.c.bf16 %v437, %v429
    %v758 = vpack.c.bf16 %v446, %v438
    %v759 = vpack.c.bf16 %v447, %v439
    %v760 = vpack.c.bf16 %v448, %v440
    %v761 = vpack.c.bf16 %v449, %v441
    %v762 = vpack.c.bf16 %v450, %v442
    %v763 = vpack.c.bf16 %v451, %v443
    %v764 = vpack.c.bf16 %v452, %v444
    %v765 = vpack.c.bf16 %v453, %v445
    %v766 = vpack.c.bf16 %v462, %v454
    %v767 = vpack.c.bf16 %v463, %v455
    %v768 = vpack.c.bf16 %v464, %v456
    %v769 = vpack.c.bf16 %v465, %v457
    %v770 = vpack.c.bf16 %v466, %v458
    %v771 = vpack.c.bf16 %v467, %v459
    %v772 = vpack.c.bf16 %v468, %v460
    %v773 = vpack.c.bf16 %v469, %v461
    %v774 = vpack.c.bf16 %v478, %v470
    %v775 = vpack.c.bf16 %v479, %v471
    %v776 = vpack.c.bf16 %v480, %v472
    %v777 = vpack.c.bf16 %v481, %v473
    %v778 = vpack.c.bf16 %v482, %v474
    %v779 = vpack.c.bf16 %v483, %v475
    %v780 = vpack.c.bf16 %v484, %v476
    %v781 = vpack.c.bf16 %v485, %v477
    %v782 = vpack.c.bf16 %v494, %v486
    %v783 = vpack.c.bf16 %v495, %v487
    %v784 = vpack.c.bf16 %v496, %v488
    %v785 = vpack.c.bf16 %v497, %v489
    %v786 = vpack.c.bf16 %v498, %v490
    %v787 = vpack.c.bf16 %v499, %v491
    %v788 = vpack.c.bf16 %v500, %v492
    %v789 = vpack.c.bf16 %v501, %v493
    %v790 = vpack.c.bf16 %v510, %v502
    %v791 = vpack.c.bf16 %v511, %v503
    %v792 = vpack.c.bf16 %v512, %v504
    %v793 = vpack.c.bf16 %v513, %v505
    %v794 = vpack.c.bf16 %v514, %v506
    %v795 = vpack.c.bf16 %v515, %v507
    %v796 = vpack.c.bf16 %v516, %v508
    %v797 = vpack.c.bf16 %v517, %v509
    %v798 = vpack.c.bf16 %v526, %v518
    %v799 = vpack.c.bf16 %v527, %v519
    %v800 = vpack.c.bf16 %v528, %v520
    %v801 = vpack.c.bf16 %v529, %v521
    %v802 = vpack.c.bf16 %v530, %v522
    %v803 = vpack.c.bf16 %v531, %v523
    %v804 = vpack.c.bf16 %v532, %v524
    %v805 = vpack.c.bf16 %v533, %v525
    %v806 = vpack.c.bf16 %v542, %v534
    %v807 = vpack.c.bf16 %v543, %v535
    %v808 = vpack.c.bf16 %v544, %v536
    %v809 = vpack.c.bf16 %v545, %v537
    %v810 = vpack.c.bf16 %v546, %v538
    %v811 = vpack.c.bf16 %v547, %v539
    %v812 = vpack.c.bf16 %v548, %v540
    %v813 = vpack.c.bf16 %v549, %v541
    %v814 = vpack.c.bf16 %v558, %v550
    %v815 = vpack.c.bf16 %v559, %v551
    %v816 = vpack.c.bf16 %v560, %v552
    %v817 = vpack.c.bf16 %v561, %v553
    %v818 = vpack.c.bf16 %v562, %v554
    %v819 = vpack.c.bf16 %v563, %v555
    %v820 = vpack.c.bf16 %v564, %v556
    %v821 = vpack.c.bf16 %v565, %v557
    %v822 = vld [vmem:[#allocation4] sm:$0xf]
    %v823 = vld [vmem:[#allocation4 + $0x4] sm:$0xf]
    %v824 = vld [vmem:[#allocation4 + $0x8] sm:$0xf]
    %v825 = vld [vmem:[#allocation4 + $0xc] sm:$0xf]
    %v826 = vld [vmem:[#allocation4 + $0x10] sm:$0xf]
    %v827 = vld [vmem:[#allocation4 + $0x14] sm:$0xf]
    %v828 = vld [vmem:[#allocation4 + $0x18] sm:$0xf]
    %v829 = vld [vmem:[#allocation4 + $0x1c] sm:$0xf]
    %v830 = vld [vmem:[#allocation4 + $0x20] sm:$0xf]
    %v831 = vld [vmem:[#allocation4 + $0x24] sm:$0xf]
    %v832 = vld [vmem:[#allocation4 + $0x28] sm:$0xf]
    %v833 = vld [vmem:[#allocation4 + $0x2c] sm:$0xf]
    %v834 = vld [vmem:[#allocation4 + $0x30] sm:$0xf]
    %v835 = vld [vmem:[#allocation4 + $0x34] sm:$0xf]
    %v836 = vld [vmem:[#allocation4 + $0x38] sm:$0xf]
    %v837 = vld [vmem:[#allocation4 + $0x3c] sm:$0xf]
    %v838 = vld [vmem:[#allocation4 + $0x40] sm:$0xf]
    %v839 = vld [vmem:[#allocation4 + $0x44] sm:$0xf]
    %v840 = vld [vmem:[#allocation4 + $0x48] sm:$0xf]
    %v841 = vld [vmem:[#allocation4 + $0x4c] sm:$0xf]
    %v842 = vld [vmem:[#allocation4 + $0x50] sm:$0xf]
    %v843 = vld [vmem:[#allocation4 + $0x54] sm:$0xf]
    %v844 = vld [vmem:[#allocation4 + $0x58] sm:$0xf]
    %v845 = vld [vmem:[#allocation4 + $0x5c] sm:$0xf]
    %v846 = vld [vmem:[#allocation4 + $0x60] sm:$0xf]
    %v847 = vld [vmem:[#allocation4 + $0x64] sm:$0xf]
    %v848 = vld [vmem:[#allocation4 + $0x68] sm:$0xf]
    %v849 = vld [vmem:[#allocation4 + $0x6c] sm:$0xf]
    %v850 = vld [vmem:[#allocation4 + $0x70] sm:$0xf]
    %v851 = vld [vmem:[#allocation4 + $0x74] sm:$0xf]
    %v852 = vld [vmem:[#allocation4 + $0x78] sm:$0xf]
    %v853 = vld [vmem:[#allocation4 + $0x7c] sm:$0xf]
    %v854 = vld [vmem:[#allocation4 + $0x80] sm:$0xf]
    %v855 = vld [vmem:[#allocation4 + $0x84] sm:$0xf]
    %v856 = vld [vmem:[#allocation4 + $0x88] sm:$0xf]
    %v857 = vld [vmem:[#allocation4 + $0x8c] sm:$0xf]
    %v858 = vld [vmem:[#allocation4 + $0x90] sm:$0xf]
    %v859 = vld [vmem:[#allocation4 + $0x94] sm:$0xf]
    %v860 = vld [vmem:[#allocation4 + $0x98] sm:$0xf]
    %v861 = vld [vmem:[#allocation4 + $0x9c] sm:$0xf]
    %v862 = vld [vmem:[#allocation4 + $0xa0] sm:$0xf]
    %v863 = vld [vmem:[#allocation4 + $0xa4] sm:$0xf]
    %v864 = vld [vmem:[#allocation4 + $0xa8] sm:$0xf]
    %v865 = vld [vmem:[#allocation4 + $0xac] sm:$0xf]
    %v866 = vld [vmem:[#allocation4 + $0xb0] sm:$0xf]
    %v867 = vld [vmem:[#allocation4 + $0xb4] sm:$0xf]
    %v868 = vld [vmem:[#allocation4 + $0xb8] sm:$0xf]
    %v869 = vld [vmem:[#allocation4 + $0xbc] sm:$0xf]
    %v870 = vld [vmem:[#allocation4 + $0xc0] sm:$0xf]
    %v871 = vld [vmem:[#allocation4 + $0xc4] sm:$0xf]
    %v872 = vld [vmem:[#allocation4 + $0xc8] sm:$0xf]
    %v873 = vld [vmem:[#allocation4 + $0xcc] sm:$0xf]
    %v874 = vld [vmem:[#allocation4 + $0xd0] sm:$0xf]
    %v875 = vld [vmem:[#allocation4 + $0xd4] sm:$0xf]
    %v876 = vld [vmem:[#allocation4 + $0xd8] sm:$0xf]
    %v877 = vld [vmem:[#allocation4 + $0xdc] sm:$0xf]
    %v878 = vld [vmem:[#allocation4 + $0xe0] sm:$0xf]
    %v879 = vld [vmem:[#allocation4 + $0xe4] sm:$0xf]
    %v880 = vld [vmem:[#allocation4 + $0xe8] sm:$0xf]
    %v881 = vld [vmem:[#allocation4 + $0xec] sm:$0xf]
    %v882 = vld [vmem:[#allocation4 + $0xf0] sm:$0xf]
    %v883 = vld [vmem:[#allocation4 + $0xf4] sm:$0xf]
    %v884 = vld [vmem:[#allocation4 + $0xf8] sm:$0xf]
    %v885 = vld [vmem:[#allocation4 + $0xfc] sm:$0xf]
    %v886 = vld [vmem:[#allocation4 + $0x100] sm:$0xf]
    %v887 = vld [vmem:[#allocation4 + $0x104] sm:$0xf]
    %v888 = vld [vmem:[#allocation4 + $0x108] sm:$0xf]
    %v889 = vld [vmem:[#allocation4 + $0x10c] sm:$0xf]
    %v890 = vld [vmem:[#allocation4 + $0x110] sm:$0xf]
    %v891 = vld [vmem:[#allocation4 + $0x114] sm:$0xf]
    %v892 = vld [vmem:[#allocation4 + $0x118] sm:$0xf]
    %v893 = vld [vmem:[#allocation4 + $0x11c] sm:$0xf]
    %v894 = vld [vmem:[#allocation4 + $0x120] sm:$0xf]
    %v895 = vld [vmem:[#allocation4 + $0x124] sm:$0xf]
    %v896 = vld [vmem:[#allocation4 + $0x128] sm:$0xf]
    %v897 = vld [vmem:[#allocation4 + $0x12c] sm:$0xf]
    %v898 = vld [vmem:[#allocation4 + $0x130] sm:$0xf]
    %v899 = vld [vmem:[#allocation4 + $0x134] sm:$0xf]
    %v900 = vld [vmem:[#allocation4 + $0x138] sm:$0xf]
    %v901 = vld [vmem:[#allocation4 + $0x13c] sm:$0xf]
    %v902 = vld [vmem:[#allocation4 + $0x140] sm:$0xf]
    %v903 = vld [vmem:[#allocation4 + $0x144] sm:$0xf]
    %v904 = vld [vmem:[#allocation4 + $0x148] sm:$0xf]
    %v905 = vld [vmem:[#allocation4 + $0x14c] sm:$0xf]
    %v906 = vld [vmem:[#allocation4 + $0x150] sm:$0xf]
    %v907 = vld [vmem:[#allocation4 + $0x154] sm:$0xf]
    %v908 = vld [vmem:[#allocation4 + $0x158] sm:$0xf]
    %v909 = vld [vmem:[#allocation4 + $0x15c] sm:$0xf]
    %v910 = vld [vmem:[#allocation4 + $0x160] sm:$0xf]
    %v911 = vld [vmem:[#allocation4 + $0x164] sm:$0xf]
    %v912 = vld [vmem:[#allocation4 + $0x168] sm:$0xf]
    %v913 = vld [vmem:[#allocation4 + $0x16c] sm:$0xf]
    %v914 = vld [vmem:[#allocation4 + $0x170] sm:$0xf]
    %v915 = vld [vmem:[#allocation4 + $0x174] sm:$0xf]
    %v916 = vld [vmem:[#allocation4 + $0x178] sm:$0xf]
    %v917 = vld [vmem:[#allocation4 + $0x17c] sm:$0xf]
    %v918 = vld [vmem:[#allocation4 + $0x180] sm:$0xf]
    %v919 = vld [vmem:[#allocation4 + $0x184] sm:$0xf]
    %v920 = vld [vmem:[#allocation4 + $0x188] sm:$0xf]
    %v921 = vld [vmem:[#allocation4 + $0x18c] sm:$0xf]
    %v922 = vld [vmem:[#allocation4 + $0x190] sm:$0xf]
    %v923 = vld [vmem:[#allocation4 + $0x194] sm:$0xf]
    %v924 = vld [vmem:[#allocation4 + $0x198] sm:$0xf]
    %v925 = vld [vmem:[#allocation4 + $0x19c] sm:$0xf]
    %v926 = vld [vmem:[#allocation4 + $0x1a0] sm:$0xf]
    %v927 = vld [vmem:[#allocation4 + $0x1a4] sm:$0xf]
    %v928 = vld [vmem:[#allocation4 + $0x1a8] sm:$0xf]
    %v929 = vld [vmem:[#allocation4 + $0x1ac] sm:$0xf]
    %v930 = vld [vmem:[#allocation4 + $0x1b0] sm:$0xf]
    %v931 = vld [vmem:[#allocation4 + $0x1b4] sm:$0xf]
    %v932 = vld [vmem:[#allocation4 + $0x1b8] sm:$0xf]
    %v933 = vld [vmem:[#allocation4 + $0x1bc] sm:$0xf]
    %v934 = vld [vmem:[#allocation4 + $0x1c0] sm:$0xf]
    %v935 = vld [vmem:[#allocation4 + $0x1c4] sm:$0xf]
    %v936 = vld [vmem:[#allocation4 + $0x1c8] sm:$0xf]
    %v937 = vld [vmem:[#allocation4 + $0x1cc] sm:$0xf]
    %v938 = vld [vmem:[#allocation4 + $0x1d0] sm:$0xf]
    %v939 = vld [vmem:[#allocation4 + $0x1d4] sm:$0xf]
    %v940 = vld [vmem:[#allocation4 + $0x1d8] sm:$0xf]
    %v941 = vld [vmem:[#allocation4 + $0x1dc] sm:$0xf]
    %v942 = vld [vmem:[#allocation4 + $0x1e0] sm:$0xf]
    %v943 = vld [vmem:[#allocation4 + $0x1e4] sm:$0xf]
    %v944 = vld [vmem:[#allocation4 + $0x1e8] sm:$0xf]
    %v945 = vld [vmem:[#allocation4 + $0x1ec] sm:$0xf]
    %v946 = vld [vmem:[#allocation4 + $0x1f0] sm:$0xf]
    %v947 = vld [vmem:[#allocation4 + $0x1f4] sm:$0xf]
    %v948 = vld [vmem:[#allocation4 + $0x1f8] sm:$0xf]
    %v949 = vld [vmem:[#allocation4 + $0x1fc] sm:$0xf]
    %v950 = vld [vmem:[#allocation6] sm:$0x1]
    %v952 = vlaneseq
    %v953 = vshrl.u32 %v952, 7
    %v954 = vsub.s32 0, %v953
    %v955 = vrot.slane %v950, %v954
    %v1085 = vunpack.c.l.b16 %v822
    %v1086 = vunpack.c.l.b16 %v823
    %v1087 = vunpack.c.l.b16 %v824
    %v1088 = vunpack.c.l.b16 %v825
    %v1089 = vunpack.c.l.b16 %v826
    %v1090 = vunpack.c.l.b16 %v827
    %v1091 = vunpack.c.l.b16 %v828
    %v1092 = vunpack.c.l.b16 %v829
    %v1093 = vunpack.c.l.b16 %v830
    %v1094 = vunpack.c.l.b16 %v831
    %v1095 = vunpack.c.l.b16 %v832
    %v1096 = vunpack.c.l.b16 %v833
    %v1097 = vunpack.c.l.b16 %v834
    %v1098 = vunpack.c.l.b16 %v835
    %v1099 = vunpack.c.l.b16 %v836
    %v1100 = vunpack.c.l.b16 %v837
    %v1101 = vunpack.c.l.b16 %v838
    %v1102 = vunpack.c.l.b16 %v839
    %v1103 = vunpack.c.l.b16 %v840
    %v1104 = vunpack.c.l.b16 %v841
    %v1105 = vunpack.c.l.b16 %v842
    %v1106 = vunpack.c.l.b16 %v843
    %v1107 = vunpack.c.l.b16 %v844
    %v1108 = vunpack.c.l.b16 %v845
    %v1109 = vunpack.c.l.b16 %v846
    %v1110 = vunpack.c.l.b16 %v847
    %v1111 = vunpack.c.l.b16 %v848
    %v1112 = vunpack.c.l.b16 %v849
    %v1113 = vunpack.c.l.b16 %v850
    %v1114 = vunpack.c.l.b16 %v851
    %v1115 = vunpack.c.l.b16 %v852
    %v1116 = vunpack.c.l.b16 %v853
    %v1117 = vunpack.c.l.b16 %v854
    %v1118 = vunpack.c.l.b16 %v855
    %v1119 = vunpack.c.l.b16 %v856
    %v1120 = vunpack.c.l.b16 %v857
    %v1121 = vunpack.c.l.b16 %v858
    %v1122 = vunpack.c.l.b16 %v859
    %v1123 = vunpack.c.l.b16 %v860
    %v1124 = vunpack.c.l.b16 %v861
    %v1125 = vunpack.c.l.b16 %v862
    %v1126 = vunpack.c.l.b16 %v863
    %v1127 = vunpack.c.l.b16 %v864
    %v1128 = vunpack.c.l.b16 %v865
    %v1129 = vunpack.c.l.b16 %v866
    %v1130 = vunpack.c.l.b16 %v867
    %v1131 = vunpack.c.l.b16 %v868
    %v1132 = vunpack.c.l.b16 %v869
    %v1133 = vunpack.c.l.b16 %v870
    %v1134 = vunpack.c.l.b16 %v871
    %v1135 = vunpack.c.l.b16 %v872
    %v1136 = vunpack.c.l.b16 %v873
    %v1137 = vunpack.c.l.b16 %v874
    %v1138 = vunpack.c.l.b16 %v875
    %v1139 = vunpack.c.l.b16 %v876
    %v1140 = vunpack.c.l.b16 %v877
    %v1141 = vunpack.c.l.b16 %v878
    %v1142 = vunpack.c.l.b16 %v879
    %v1143 = vunpack.c.l.b16 %v880
    %v1144 = vunpack.c.l.b16 %v881
    %v1145 = vunpack.c.l.b16 %v882
    %v1146 = vunpack.c.l.b16 %v883
    %v1147 = vunpack.c.l.b16 %v884
    %v1148 = vunpack.c.l.b16 %v885
    %v1149 = vunpack.c.l.b16 %v886
    %v1150 = vunpack.c.l.b16 %v887
    %v1151 = vunpack.c.l.b16 %v888
    %v1152 = vunpack.c.l.b16 %v889
    %v1153 = vunpack.c.l.b16 %v890
    %v1154 = vunpack.c.l.b16 %v891
    %v1155 = vunpack.c.l.b16 %v892
    %v1156 = vunpack.c.l.b16 %v893
    %v1157 = vunpack.c.l.b16 %v894
    %v1158 = vunpack.c.l.b16 %v895
    %v1159 = vunpack.c.l.b16 %v896
    %v1160 = vunpack.c.l.b16 %v897
    %v1161 = vunpack.c.l.b16 %v898
    %v1162 = vunpack.c.l.b16 %v899
    %v1163 = vunpack.c.l.b16 %v900
    %v1164 = vunpack.c.l.b16 %v901
    %v1165 = vunpack.c.l.b16 %v902
    %v1166 = vunpack.c.l.b16 %v903
    %v1167 = vunpack.c.l.b16 %v904
    %v1168 = vunpack.c.l.b16 %v905
    %v1169 = vunpack.c.l.b16 %v906
    %v1170 = vunpack.c.l.b16 %v907
    %v1171 = vunpack.c.l.b16 %v908
    %v1172 = vunpack.c.l.b16 %v909
    %v1173 = vunpack.c.l.b16 %v910
    %v1174 = vunpack.c.l.b16 %v911
    %v1175 = vunpack.c.l.b16 %v912
    %v1176 = vunpack.c.l.b16 %v913
    %v1177 = vunpack.c.l.b16 %v914
    %v1178 = vunpack.c.l.b16 %v915
    %v1179 = vunpack.c.l.b16 %v916
    %v1180 = vunpack.c.l.b16 %v917
    %v1181 = vunpack.c.l.b16 %v918
    %v1182 = vunpack.c.l.b16 %v919
    %v1183 = vunpack.c.l.b16 %v920
    %v1184 = vunpack.c.l.b16 %v921
    %v1185 = vunpack.c.l.b16 %v922
    %v1186 = vunpack.c.l.b16 %v923
    %v1187 = vunpack.c.l.b16 %v924
    %v1188 = vunpack.c.l.b16 %v925
    %v1189 = vunpack.c.l.b16 %v926
    %v1190 = vunpack.c.l.b16 %v927
    %v1191 = vunpack.c.l.b16 %v928
    %v1192 = vunpack.c.l.b16 %v929
    %v1193 = vunpack.c.l.b16 %v930
    %v1194 = vunpack.c.l.b16 %v931
    %v1195 = vunpack.c.l.b16 %v932
    %v1196 = vunpack.c.l.b16 %v933
    %v1197 = vunpack.c.l.b16 %v934
    %v1198 = vunpack.c.l.b16 %v935
    %v1199 = vunpack.c.l.b16 %v936
    %v1200 = vunpack.c.l.b16 %v937
    %v1201 = vunpack.c.l.b16 %v938
    %v1202 = vunpack.c.l.b16 %v939
    %v1203 = vunpack.c.l.b16 %v940
    %v1204 = vunpack.c.l.b16 %v941
    %v1205 = vunpack.c.l.b16 %v942
    %v1206 = vunpack.c.l.b16 %v943
    %v1207 = vunpack.c.l.b16 %v944
    %v1208 = vunpack.c.l.b16 %v945
    %v1209 = vunpack.c.l.b16 %v946
    %v1210 = vunpack.c.l.b16 %v947
    %v1211 = vunpack.c.l.b16 %v948
    %v1212 = vunpack.c.l.b16 %v949
    %v1213 = vpack.c.b16 %v1086, %v1085
    %v1214 = vpack.c.b16 %v1088, %v1087
    %v1215 = vpack.c.b16 %v1090, %v1089
    %v1216 = vpack.c.b16 %v1092, %v1091
    %v1217 = vpack.c.b16 %v1094, %v1093
    %v1218 = vpack.c.b16 %v1096, %v1095
    %v1219 = vpack.c.b16 %v1098, %v1097
    %v1220 = vpack.c.b16 %v1100, %v1099
    %v1221 = vpack.c.b16 %v1102, %v1101
    %v1222 = vpack.c.b16 %v1104, %v1103
    %v1223 = vpack.c.b16 %v1106, %v1105
    %v1224 = vpack.c.b16 %v1108, %v1107
    %v1225 = vpack.c.b16 %v1110, %v1109
    %v1226 = vpack.c.b16 %v1112, %v1111
    %v1227 = vpack.c.b16 %v1114, %v1113
    %v1228 = vpack.c.b16 %v1116, %v1115
    %v1229 = vpack.c.b16 %v1118, %v1117
    %v1230 = vpack.c.b16 %v1120, %v1119
    %v1231 = vpack.c.b16 %v1122, %v1121
    %v1232 = vpack.c.b16 %v1124, %v1123
    %v1233 = vpack.c.b16 %v1126, %v1125
    %v1234 = vpack.c.b16 %v1128, %v1127
    %v1235 = vpack.c.b16 %v1130, %v1129
    %v1236 = vpack.c.b16 %v1132, %v1131
    %v1237 = vpack.c.b16 %v1134, %v1133
    %v1238 = vpack.c.b16 %v1136, %v1135
    %v1239 = vpack.c.b16 %v1138, %v1137
    %v1240 = vpack.c.b16 %v1140, %v1139
    %v1241 = vpack.c.b16 %v1142, %v1141
    %v1242 = vpack.c.b16 %v1144, %v1143
    %v1243 = vpack.c.b16 %v1146, %v1145
    %v1244 = vpack.c.b16 %v1148, %v1147
    %v1245 = vpack.c.b16 %v1150, %v1149
    %v1246 = vpack.c.b16 %v1152, %v1151
    %v1247 = vpack.c.b16 %v1154, %v1153
    %v1248 = vpack.c.b16 %v1156, %v1155
    %v1249 = vpack.c.b16 %v1158, %v1157
    %v1250 = vpack.c.b16 %v1160, %v1159
    %v1251 = vpack.c.b16 %v1162, %v1161
    %v1252 = vpack.c.b16 %v1164, %v1163
    %v1253 = vpack.c.b16 %v1166, %v1165
    %v1254 = vpack.c.b16 %v1168, %v1167
    %v1255 = vpack.c.b16 %v1170, %v1169
    %v1256 = vpack.c.b16 %v1172, %v1171
    %v1257 = vpack.c.b16 %v1174, %v1173
    %v1258 = vpack.c.b16 %v1176, %v1175
    %v1259 = vpack.c.b16 %v1178, %v1177
    %v1260 = vpack.c.b16 %v1180, %v1179
    %v1261 = vpack.c.b16 %v1182, %v1181
    %v1262 = vpack.c.b16 %v1184, %v1183
    %v1263 = vpack.c.b16 %v1186, %v1185
    %v1264 = vpack.c.b16 %v1188, %v1187
    %v1265 = vpack.c.b16 %v1190, %v1189
    %v1266 = vpack.c.b16 %v1192, %v1191
    %v1267 = vpack.c.b16 %v1194, %v1193
    %v1268 = vpack.c.b16 %v1196, %v1195
    %v1269 = vpack.c.b16 %v1198, %v1197
    %v1270 = vpack.c.b16 %v1200, %v1199
    %v1271 = vpack.c.b16 %v1202, %v1201
    %v1272 = vpack.c.b16 %v1204, %v1203
    %v1273 = vpack.c.b16 %v1206, %v1205
    %v1274 = vpack.c.b16 %v1208, %v1207
    %v1275 = vpack.c.b16 %v1210, %v1209
    %v1276 = vpack.c.b16 %v1212, %v1211
    %1341 = vmatprep.subr.bf16.mxu0 0
    %1342 = vmatpush1.bf16.msra.mxu0 %v1213
    %1343 = vmatprep.subr.bf16.mxu0 0
    %1344 = vmatpush1.bf16.msra.mxu0 %v1214
    %1345 = vmatprep.subr.bf16.mxu0 0
    %1346 = vmatpush1.bf16.msra.mxu0 %v1215
    %1347 = vmatprep.subr.bf16.mxu0 0
    %1348 = vmatpush1.bf16.msra.mxu0 %v1216
    %1349 = vmatprep.subr.bf16.mxu0 0
    %1350 = vmatpush1.bf16.msra.mxu0 %v1217
    %1351 = vmatprep.subr.bf16.mxu0 0
    %1352 = vmatpush1.bf16.msra.mxu0 %v1218
    %1353 = vmatprep.subr.bf16.mxu0 0
    %1354 = vmatpush1.bf16.msra.mxu0 %v1219
    %1355 = vmatprep.subr.bf16.mxu0 0
    %1356 = vmatpush1.bf16.msra.mxu0 %v1220
    %1357 = vmatprep.subr.bf16.mxu0 0
    %1358 = vmatpush1.bf16.msra.mxu0 %v1221
    %1359 = vmatprep.subr.bf16.mxu0 0
    %1360 = vmatpush1.bf16.msra.mxu0 %v1222
    %1361 = vmatprep.subr.bf16.mxu0 0
    %1362 = vmatpush1.bf16.msra.mxu0 %v1223
    %1363 = vmatprep.subr.bf16.mxu0 0
    %1364 = vmatpush1.bf16.msra.mxu0 %v1224
    %1365 = vmatprep.subr.bf16.mxu0 0
    %1366 = vmatpush1.bf16.msra.mxu0 %v1225
    %1367 = vmatprep.subr.bf16.mxu0 0
    %1368 = vmatpush1.bf16.msra.mxu0 %v1226
    %1369 = vmatprep.subr.bf16.mxu0 0
    %1370 = vmatpush1.bf16.msra.mxu0 %v1227
    %1371 = vmatprep.subr.bf16.mxu0 0
    %1372 = vmatpush1.bf16.msra.mxu0 %v1228
    %1373 = vmatprep.mubr.bf16.mxu0 %v567
    %1374 = vmatmul.mubr.bf16.gmra.mrb[0].mxu0 %v566
    %v1375 = vpop.f32.mrb[0].mxu0
    %v1376 = vadd.f32 %v955, %v1375
    %v1377 = vpop.f32.mrb[0].mxu0
    %v1378 = vpop.f32.mrb[0].mxu0
    %v1379 = vadd.f32 %v955, %v1378
    %v1380 = vpop.f32.mrb[0].mxu0
    %1381 = vmatprep.mubr.bf16.mxu0 %v575
    %1382 = vmatmul.mubr.bf16.gmra.mrb[0].mxu0 %v574
    %v1383 = vpop.f32.mrb[0].mxu0
    %v1384 = vadd.f32 %v955, %v1383
    %v1385 = vpop.f32.mrb[0].mxu0
    %v1386 = vpop.f32.mrb[0].mxu0
    %v1387 = vadd.f32 %v955, %v1386
    %v1388 = vpop.f32.mrb[0].mxu0
    %1389 = vmatprep.mubr.bf16.mxu0 %v583
    %1390 = vmatmul.mubr.bf16.gmra.mrb[0].mxu0 %v582
    %v1391 = vpop.f32.mrb[0].mxu0
    %v1392 = vadd.f32 %v955, %v1391
    %v1393 = vpop.f32.mrb[0].mxu0
    %v1394 = vpop.f32.mrb[0].mxu0
    %v1395 = vadd.f32 %v955, %v1394
    %v1396 = vpop.f32.mrb[0].mxu0
    %1397 = vmatprep.mubr.bf16.mxu0 %v591
    %1398 = vmatmul.mubr.bf16.gmra.mrb[0].mxu0 %v590
    %v1399 = vpop.f32.mrb[0].mxu0
    %v1400 = vadd.f32 %v955, %v1399
    %v1401 = vpop.f32.mrb[0].mxu0
    %v1402 = vpop.f32.mrb[0].mxu0
    %v1403 = vadd.f32 %v955, %v1402
    %v1404 = vpop.f32.mrb[0].mxu0
    %1405 = vmatprep.mubr.bf16.mxu0 %v599
    %1406 = vmatmul.mubr.bf16.gmra.mrb[0].mxu0 %v598
    %v1407 = vpop.f32.mrb[0].mxu0
    %v1408 = vadd.f32 %v955, %v1407
    %v1409 = vpop.f32.mrb[0].mxu0
    %v1410 = vpop.f32.mrb[0].mxu0
    %v1411 = vadd.f32 %v955, %v1410
    %v1412 = vpop.f32.mrb[0].mxu0
    %1413 = vmatprep.mubr.bf16.mxu0 %v607
    %1414 = vmatmul.mubr.bf16.gmra.mrb[0].mxu0 %v606
    %v1415 = vpop.f32.mrb[0].mxu0
    %v1416 = vadd.f32 %v955, %v1415
    %v1417 = vpop.f32.mrb[0].mxu0
    %v1418 = vpop.f32.mrb[0].mxu0
    %v1419 = vadd.f32 %v955, %v1418
    %v1420 = vpop.f32.mrb[0].mxu0
    %1421 = vmatprep.mubr.bf16.mxu0 %v615
    %1422 = vmatmul.mubr.bf16.gmra.mrb[0].mxu0 %v614
    %v1423 = vpop.f32.mrb[0].mxu0
    %v1424 = vadd.f32 %v955, %v1423
    %v1425 = vpop.f32.mrb[0].mxu0
    %v1426 = vpop.f32.mrb[0].mxu0
    %v1427 = vadd.f32 %v955, %v1426
    %v1428 = vpop.f32.mrb[0].mxu0
    %1429 = vmatprep.mubr.bf16.mxu0 %v623
    %1430 = vmatmul.mubr.bf16.gmra.mrb[0].mxu0 %v622
    %v1431 = vpop.f32.mrb[0].mxu0
    %v1432 = vadd.f32 %v955, %v1431
    %v1433 = vpop.f32.mrb[0].mxu0
    %v1434 = vpop.f32.mrb[0].mxu0
    %v1435 = vadd.f32 %v955, %v1434
    %v1436 = vpop.f32.mrb[0].mxu0
    %1437 = vmatprep.mubr.bf16.mxu0 %v631
    %1438 = vmatmul.mubr.bf16.gmra.mrb[0].mxu0 %v630
    %v1439 = vpop.f32.mrb[0].mxu0
    %v1440 = vadd.f32 %v955, %v1439
    %v1441 = vpop.f32.mrb[0].mxu0
    %v1442 = vpop.f32.mrb[0].mxu0
    %v1443 = vadd.f32 %v955, %v1442
    %v1444 = vpop.f32.mrb[0].mxu0
    %1445 = vmatprep.mubr.bf16.mxu0 %v639
    %1446 = vmatmul.mubr.bf16.gmra.mrb[0].mxu0 %v638
    %v1447 = vpop.f32.mrb[0].mxu0
    %v1448 = vadd.f32 %v955, %v1447
    %v1449 = vpop.f32.mrb[0].mxu0
    %v1450 = vpop.f32.mrb[0].mxu0
    %v1451 = vadd.f32 %v955, %v1450
    %v1452 = vpop.f32.mrb[0].mxu0
    %1453 = vmatprep.mubr.bf16.mxu0 %v647
    %1454 = vmatmul.mubr.bf16.gmra.mrb[0].mxu0 %v646
    %v1455 = vpop.f32.mrb[0].mxu0
    %v1456 = vadd.f32 %v955, %v1455
    %v1457 = vpop.f32.mrb[0].mxu0
    %v1458 = vpop.f32.mrb[0].mxu0
    %v1459 = vadd.f32 %v955, %v1458
    %v1460 = vpop.f32.mrb[0].mxu0
    %1461 = vmatprep.mubr.bf16.mxu0 %v655
    %1462 = vmatmul.mubr.bf16.gmra.mrb[0].mxu0 %v654
    %v1463 = vpop.f32.mrb[0].mxu0
    %v1464 = vadd.f32 %v955, %v1463
    %v1465 = vpop.f32.mrb[0].mxu0
    %v1466 = vpop.f32.mrb[0].mxu0
    %v1467 = vadd.f32 %v955, %v1466
    %v1468 = vpop.f32.mrb[0].mxu0
    %1469 = vmatprep.mubr.bf16.mxu0 %v663
    %1470 = vmatmul.mubr.bf16.gmra.mrb[0].mxu0 %v662
    %v1471 = vpop.f32.mrb[0].mxu0
    %v1472 = vadd.f32 %v955, %v1471
    %v1473 = vpop.f32.mrb[0].mxu0
    %v1474 = vpop.f32.mrb[0].mxu0
    %v1475 = vadd.f32 %v955, %v1474
    %v1476 = vpop.f32.mrb[0].mxu0
    %1477 = vmatprep.mubr.bf16.mxu0 %v671
    %1478 = vmatmul.mubr.bf16.gmra.mrb[0].mxu0 %v670
    %v1479 = vpop.f32.mrb[0].mxu0
    %v1480 = vadd.f32 %v955, %v1479
    %v1481 = vpop.f32.mrb[0].mxu0
    %v1482 = vpop.f32.mrb[0].mxu0
    %v1483 = vadd.f32 %v955, %v1482
    %v1484 = vpop.f32.mrb[0].mxu0
    %1485 = vmatprep.mubr.bf16.mxu0 %v679
    %1486 = vmatmul.mubr.bf16.gmra.mrb[0].mxu0 %v678
    %v1487 = vpop.f32.mrb[0].mxu0
    %v1488 = vadd.f32 %v955, %v1487
    %v1489 = vpop.f32.mrb[0].mxu0
    %v1490 = vpop.f32.mrb[0].mxu0
    %v1491 = vadd.f32 %v955, %v1490
    %v1492 = vpop.f32.mrb[0].mxu0
    %1493 = vmatprep.mubr.bf16.mxu0 %v687
    %1494 = vmatmul.mubr.bf16.gmra.mrb[0].mxu0 %v686
    %v1495 = vpop.f32.mrb[0].mxu0
    %v1496 = vadd.f32 %v955, %v1495
    %v1497 = vpop.f32.mrb[0].mxu0
    %v1498 = vpop.f32.mrb[0].mxu0
    %v1499 = vadd.f32 %v955, %v1498
    %v1500 = vpop.f32.mrb[0].mxu0
    %1501 = vmatprep.mubr.bf16.mxu0 %v695
    %1502 = vmatmul.mubr.bf16.gmra.mrb[0].mxu0 %v694
    %v1503 = vpop.f32.mrb[0].mxu0
    %v1504 = vadd.f32 %v955, %v1503
    %v1505 = vpop.f32.mrb[0].mxu0
    %v1506 = vpop.f32.mrb[0].mxu0
    %v1507 = vadd.f32 %v955, %v1506
    %v1508 = vpop.f32.mrb[0].mxu0
    %1509 = vmatprep.mubr.bf16.mxu0 %v703
    %1510 = vmatmul.mubr.bf16.gmra.mrb[0].mxu0 %v702
    %v1511 = vpop.f32.mrb[0].mxu0
    %v1512 = vadd.f32 %v955, %v1511
    %v1513 = vpop.f32.mrb[0].mxu0
    %v1514 = vpop.f32.mrb[0].mxu0
    %v1515 = vadd.f32 %v955, %v1514
    %v1516 = vpop.f32.mrb[0].mxu0
    %1517 = vmatprep.mubr.bf16.mxu0 %v711
    %1518 = vmatmul.mubr.bf16.gmra.mrb[0].mxu0 %v710
    %v1519 = vpop.f32.mrb[0].mxu0
    %v1520 = vadd.f32 %v955, %v1519
    %v1521 = vpop.f32.mrb[0].mxu0
    %v1522 = vpop.f32.mrb[0].mxu0
    %v1523 = vadd.f32 %v955, %v1522
    %v1524 = vpop.f32.mrb[0].mxu0
    %1525 = vmatprep.mubr.bf16.mxu0 %v719
    %1526 = vmatmul.mubr.bf16.gmra.mrb[0].mxu0 %v718
    %v1527 = vpop.f32.mrb[0].mxu0
    %v1528 = vadd.f32 %v955, %v1527
    %v1529 = vpop.f32.mrb[0].mxu0
    %v1530 = vpop.f32.mrb[0].mxu0
    %v1531 = vadd.f32 %v955, %v1530
    %v1532 = vpop.f32.mrb[0].mxu0
    %1533 = vmatprep.mubr.bf16.mxu0 %v727
    %1534 = vmatmul.mubr.bf16.gmra.mrb[0].mxu0 %v726
    %v1535 = vpop.f32.mrb[0].mxu0
    %v1536 = vadd.f32 %v955, %v1535
    %v1537 = vpop.f32.mrb[0].mxu0
    %v1538 = vpop.f32.mrb[0].mxu0
    %v1539 = vadd.f32 %v955, %v1538
    %v1540 = vpop.f32.mrb[0].mxu0
    %1541 = vmatprep.mubr.bf16.mxu0 %v735
    %1542 = vmatmul.mubr.bf16.gmra.mrb[0].mxu0 %v734
    %v1543 = vpop.f32.mrb[0].mxu0
    %v1544 = vadd.f32 %v955, %v1543
    %v1545 = vpop.f32.mrb[0].mxu0
    %v1546 = vpop.f32.mrb[0].mxu0
    %v1547 = vadd.f32 %v955, %v1546
    %v1548 = vpop.f32.mrb[0].mxu0
    %1549 = vmatprep.mubr.bf16.mxu0 %v743
    %1550 = vmatmul.mubr.bf16.gmra.mrb[0].mxu0 %v742
    %v1551 = vpop.f32.mrb[0].mxu0
    %v1552 = vadd.f32 %v955, %v1551
    %v1553 = vpop.f32.mrb[0].mxu0
    %v1554 = vpop.f32.mrb[0].mxu0
    %v1555 = vadd.f32 %v955, %v1554
    %v1556 = vpop.f32.mrb[0].mxu0
    %1557 = vmatprep.mubr.bf16.mxu0 %v751
    %1558 = vmatmul.mubr.bf16.gmra.mrb[0].mxu0 %v750
    %v1559 = vpop.f32.mrb[0].mxu0
    %v1560 = vadd.f32 %v955, %v1559
    %v1561 = vpop.f32.mrb[0].mxu0
    %v1562 = vpop.f32.mrb[0].mxu0
    %v1563 = vadd.f32 %v955, %v1562
    %v1564 = vpop.f32.mrb[0].mxu0
    %1565 = vmatprep.mubr.bf16.mxu0 %v759
    %1566 = vmatmul.mubr.bf16.gmra.mrb[0].mxu0 %v758
    %v1567 = vpop.f32.mrb[0].mxu0
    %v1568 = vadd.f32 %v955, %v1567
    %v1569 = vpop.f32.mrb[0].mxu0
    %v1570 = vpop.f32.mrb[0].mxu0
    %v1571 = vadd.f32 %v955, %v1570
    %v1572 = vpop.f32.mrb[0].mxu0
    %1573 = vmatprep.mubr.bf16.mxu0 %v767
    %1574 = vmatmul.mubr.bf16.gmra.mrb[0].mxu0 %v766
    %v1575 = vpop.f32.mrb[0].mxu0
    %v1576 = vadd.f32 %v955, %v1575
    %v1577 = vpop.f32.mrb[0].mxu0
    %v1578 = vpop.f32.mrb[0].mxu0
    %v1579 = vadd.f32 %v955, %v1578
    %v1580 = vpop.f32.mrb[0].mxu0
    %1581 = vmatprep.mubr.bf16.mxu0 %v775
    %1582 = vmatmul.mubr.bf16.gmra.mrb[0].mxu0 %v774
    %v1583 = vpop.f32.mrb[0].mxu0
    %v1584 = vadd.f32 %v955, %v1583
    %v1585 = vpop.f32.mrb[0].mxu0
    %v1586 = vpop.f32.mrb[0].mxu0
    %v1587 = vadd.f32 %v955, %v1586
    %v1588 = vpop.f32.mrb[0].mxu0
    %1589 = vmatprep.mubr.bf16.mxu0 %v783
    %1590 = vmatmul.mubr.bf16.gmra.mrb[0].mxu0 %v782
    %v1591 = vpop.f32.mrb[0].mxu0
    %v1592 = vadd.f32 %v955, %v1591
    %v1593 = vpop.f32.mrb[0].mxu0
    %v1594 = vpop.f32.mrb[0].mxu0
    %v1595 = vadd.f32 %v955, %v1594
    %v1596 = vpop.f32.mrb[0].mxu0
    %1597 = vmatprep.mubr.bf16.mxu0 %v791
    %1598 = vmatmul.mubr.bf16.gmra.mrb[0].mxu0 %v790
    %v1599 = vpop.f32.mrb[0].mxu0
    %v1600 = vadd.f32 %v955, %v1599
    %v1601 = vpop.f32.mrb[0].mxu0
    %v1602 = vpop.f32.mrb[0].mxu0
    %v1603 = vadd.f32 %v955, %v1602
    %v1604 = vpop.f32.mrb[0].mxu0
    %1605 = vmatprep.mubr.bf16.mxu0 %v799
    %1606 = vmatmul.mubr.bf16.gmra.mrb[0].mxu0 %v798
    %v1607 = vpop.f32.mrb[0].mxu0
    %v1608 = vadd.f32 %v955, %v1607
    %v1609 = vpop.f32.mrb[0].mxu0
    %v1610 = vpop.f32.mrb[0].mxu0
    %v1611 = vadd.f32 %v955, %v1610
    %v1612 = vpop.f32.mrb[0].mxu0
    %1613 = vmatprep.mubr.bf16.mxu0 %v807
    %1614 = vmatmul.mubr.bf16.gmra.mrb[0].mxu0 %v806
    %v1615 = vpop.f32.mrb[0].mxu0
    %v1616 = vadd.f32 %v955, %v1615
    %v1617 = vpop.f32.mrb[0].mxu0
    %v1618 = vpop.f32.mrb[0].mxu0
    %v1619 = vadd.f32 %v955, %v1618
    %v1620 = vpop.f32.mrb[0].mxu0
    %1621 = vmatprep.mubr.bf16.mxu0 %v815
    %1622 = vmatmul.mubr.bf16.gmra.mrb[0].mxu0 %v814
    %v1623 = vpop.f32.mrb[0].mxu0
    %v1624 = vadd.f32 %v955, %v1623
    %v1625 = vpop.f32.mrb[0].mxu0
    %v1626 = vpop.f32.mrb[0].mxu0
    %v1627 = vadd.f32 %v955, %v1626
    %v1628 = vpop.f32.mrb[0].mxu0
    %1629 = vdwg.mxu0
    %1630 = vmatprep.subr.bf16.mxu0 0
    %1631 = vmatpush1.bf16.msra.mxu0 %v1229
    %1632 = vmatprep.subr.bf16.mxu0 0
    %1633 = vmatpush1.bf16.msra.mxu0 %v1230
    %1634 = vmatprep.subr.bf16.mxu0 0
    %1635 = vmatpush1.bf16.msra.mxu0 %v1231
    %1636 = vmatprep.subr.bf16.mxu0 0
    %1637 = vmatpush1.bf16.msra.mxu0 %v1232
    %1638 = vmatprep.subr.bf16.mxu0 0
    %1639 = vmatpush1.bf16.msra.mxu0 %v1233
    %1640 = vmatprep.subr.bf16.mxu0 0
    %1641 = vmatpush1.bf16.msra.mxu0 %v1234
    %1642 = vmatprep.subr.bf16.mxu0 0
    %1643 = vmatpush1.bf16.msra.mxu0 %v1235
    %1644 = vmatprep.subr.bf16.mxu0 0
    %1645 = vmatpush1.bf16.msra.mxu0 %v1236
    %1646 = vmatprep.subr.bf16.mxu0 0
    %1647 = vmatpush1.bf16.msra.mxu0 %v1237
    %1648 = vmatprep.subr.bf16.mxu0 0
    %1649 = vmatpush1.bf16.msra.mxu0 %v1238
    %1650 = vmatprep.subr.bf16.mxu0 0
    %1651 = vmatpush1.bf16.msra.mxu0 %v1239
    %1652 = vmatprep.subr.bf16.mxu0 0
    %1653 = vmatpush1.bf16.msra.mxu0 %v1240
    %1654 = vmatprep.subr.bf16.mxu0 0
    %1655 = vmatpush1.bf16.msra.mxu0 %v1241
    %1656 = vmatprep.subr.bf16.mxu0 0
    %1657 = vmatpush1.bf16.msra.mxu0 %v1242
    %1658 = vmatprep.subr.bf16.mxu0 0
    %1659 = vmatpush1.bf16.msra.mxu0 %v1243
    %1660 = vmatprep.subr.bf16.mxu0 0
    %1661 = vmatpush1.bf16.msra.mxu0 %v1244
    %1662 = vmatprep.mubr.bf16.mxu0 %v569
    %1663 = vmatmul.mubr.bf16.gmra.mrb[0].mxu0 %v568
    %v1664 = vpop.f32.mrb[0].mxu0
    %v1665 = vadd.f32 %v1376, %v1664
    %v1666 = vpop.f32.mrb[0].mxu0
    %v1667 = vpop.f32.mrb[0].mxu0
    %v1668 = vadd.f32 %v1379, %v1667
    %v1669 = vpop.f32.mrb[0].mxu0
    %1670 = vmatprep.mubr.bf16.mxu0 %v577
    %1671 = vmatmul.mubr.bf16.gmra.mrb[0].mxu0 %v576
    %v1672 = vpop.f32.mrb[0].mxu0
    %v1673 = vadd.f32 %v1384, %v1672
    %v1674 = vpop.f32.mrb[0].mxu0
    %v1675 = vpop.f32.mrb[0].mxu0
    %v1676 = vadd.f32 %v1387, %v1675
    %v1677 = vpop.f32.mrb[0].mxu0
    %1678 = vmatprep.mubr.bf16.mxu0 %v585
    %1679 = vmatmul.mubr.bf16.gmra.mrb[0].mxu0 %v584
    %v1680 = vpop.f32.mrb[0].mxu0
    %v1681 = vadd.f32 %v1392, %v1680
    %v1682 = vpop.f32.mrb[0].mxu0
    %v1683 = vpop.f32.mrb[0].mxu0
    %v1684 = vadd.f32 %v1395, %v1683
    %v1685 = vpop.f32.mrb[0].mxu0
    %1686 = vmatprep.mubr.bf16.mxu0 %v593
    %1687 = vmatmul.mubr.bf16.gmra.mrb[0].mxu0 %v592
    %v1688 = vpop.f32.mrb[0].mxu0
    %v1689 = vadd.f32 %v1400, %v1688
    %v1690 = vpop.f32.mrb[0].mxu0
    %v1691 = vpop.f32.mrb[0].mxu0
    %v1692 = vadd.f32 %v1403, %v1691
    %v1693 = vpop.f32.mrb[0].mxu0
    %1694 = vmatprep.mubr.bf16.mxu0 %v601
    %1695 = vmatmul.mubr.bf16.gmra.mrb[0].mxu0 %v600
    %v1696 = vpop.f32.mrb[0].mxu0
    %v1697 = vadd.f32 %v1408, %v1696
    %v1698 = vpop.f32.mrb[0].mxu0
    %v1699 = vpop.f32.mrb[0].mxu0
    %v1700 = vadd.f32 %v1411, %v1699
    %v1701 = vpop.f32.mrb[0].mxu0
    %1702 = vmatprep.mubr.bf16.mxu0 %v609
    %1703 = vmatmul.mubr.bf16.gmra.mrb[0].mxu0 %v608
    %v1704 = vpop.f32.mrb[0].mxu0
    %v1705 = vadd.f32 %v1416, %v1704
    %v1706 = vpop.f32.mrb[0].mxu0
    %v1707 = vpop.f32.mrb[0].mxu0
    %v1708 = vadd.f32 %v1419, %v1707
    %v1709 = vpop.f32.mrb[0].mxu0
    %1710 = vmatprep.mubr.bf16.mxu0 %v617
    %1711 = vmatmul.mubr.bf16.gmra.mrb[0].mxu0 %v616
    %v1712 = vpop.f32.mrb[0].mxu0
    %v1713 = vadd.f32 %v1424, %v1712
    %v1714 = vpop.f32.mrb[0].mxu0
    %v1715 = vpop.f32.mrb[0].mxu0
    %v1716 = vadd.f32 %v1427, %v1715
    %v1717 = vpop.f32.mrb[0].mxu0
    %1718 = vmatprep.mubr.bf16.mxu0 %v625
    %1719 = vmatmul.mubr.bf16.gmra.mrb[0].mxu0 %v624
    %v1720 = vpop.f32.mrb[0].mxu0
    %v1721 = vadd.f32 %v1432, %v1720
    %v1722 = vpop.f32.mrb[0].mxu0
    %v1723 = vpop.f32.mrb[0].mxu0
    %v1724 = vadd.f32 %v1435, %v1723
    %v1725 = vpop.f32.mrb[0].mxu0
    %1726 = vmatprep.mubr.bf16.mxu0 %v633
    %1727 = vmatmul.mubr.bf16.gmra.mrb[0].mxu0 %v632
    %v1728 = vpop.f32.mrb[0].mxu0
    %v1729 = vadd.f32 %v1440, %v1728
    %v1730 = vpop.f32.mrb[0].mxu0
    %v1731 = vpop.f32.mrb[0].mxu0
    %v1732 = vadd.f32 %v1443, %v1731
    %v1733 = vpop.f32.mrb[0].mxu0
    %1734 = vmatprep.mubr.bf16.mxu0 %v641
    %1735 = vmatmul.mubr.bf16.gmra.mrb[0].mxu0 %v640
    %v1736 = vpop.f32.mrb[0].mxu0
    %v1737 = vadd.f32 %v1448, %v1736
    %v1738 = vpop.f32.mrb[0].mxu0
    %v1739 = vpop.f32.mrb[0].mxu0
    %v1740 = vadd.f32 %v1451, %v1739
    %v1741 = vpop.f32.mrb[0].mxu0
    %1742 = vmatprep.mubr.bf16.mxu0 %v649
    %1743 = vmatmul.mubr.bf16.gmra.mrb[0].mxu0 %v648
    %v1744 = vpop.f32.mrb[0].mxu0
    %v1745 = vadd.f32 %v1456, %v1744
    %v1746 = vpop.f32.mrb[0].mxu0
    %v1747 = vpop.f32.mrb[0].mxu0
    %v1748 = vadd.f32 %v1459, %v1747
    %v1749 = vpop.f32.mrb[0].mxu0
    %1750 = vmatprep.mubr.bf16.mxu0 %v657
    %1751 = vmatmul.mubr.bf16.gmra.mrb[0].mxu0 %v656
    %v1752 = vpop.f32.mrb[0].mxu0
    %v1753 = vadd.f32 %v1464, %v1752
    %v1754 = vpop.f32.mrb[0].mxu0
    %v1755 = vpop.f32.mrb[0].mxu0
    %v1756 = vadd.f32 %v1467, %v1755
    %v1757 = vpop.f32.mrb[0].mxu0
    %1758 = vmatprep.mubr.bf16.mxu0 %v665
    %1759 = vmatmul.mubr.bf16.gmra.mrb[0].mxu0 %v664
    %v1760 = vpop.f32.mrb[0].mxu0
    %v1761 = vadd.f32 %v1472, %v1760
    %v1762 = vpop.f32.mrb[0].mxu0
    %v1763 = vpop.f32.mrb[0].mxu0
    %v1764 = vadd.f32 %v1475, %v1763
    %v1765 = vpop.f32.mrb[0].mxu0
    %1766 = vmatprep.mubr.bf16.mxu0 %v673
    %1767 = vmatmul.mubr.bf16.gmra.mrb[0].mxu0 %v672
    %v1768 = vpop.f32.mrb[0].mxu0
    %v1769 = vadd.f32 %v1480, %v1768
    %v1770 = vpop.f32.mrb[0].mxu0
    %v1771 = vpop.f32.mrb[0].mxu0
    %v1772 = vadd.f32 %v1483, %v1771
    %v1773 = vpop.f32.mrb[0].mxu0
    %1774 = vmatprep.mubr.bf16.mxu0 %v681
    %1775 = vmatmul.mubr.bf16.gmra.mrb[0].mxu0 %v680
    %v1776 = vpop.f32.mrb[0].mxu0
    %v1777 = vadd.f32 %v1488, %v1776
    %v1778 = vpop.f32.mrb[0].mxu0
    %v1779 = vpop.f32.mrb[0].mxu0
    %v1780 = vadd.f32 %v1491, %v1779
    %v1781 = vpop.f32.mrb[0].mxu0
    %1782 = vmatprep.mubr.bf16.mxu0 %v689
    %1783 = vmatmul.mubr.bf16.gmra.mrb[0].mxu0 %v688
    %v1784 = vpop.f32.mrb[0].mxu0
    %v1785 = vadd.f32 %v1496, %v1784
    %v1786 = vpop.f32.mrb[0].mxu0
    %v1787 = vpop.f32.mrb[0].mxu0
    %v1788 = vadd.f32 %v1499, %v1787
    %v1789 = vpop.f32.mrb[0].mxu0
    %1790 = vmatprep.mubr.bf16.mxu0 %v697
    %1791 = vmatmul.mubr.bf16.gmra.mrb[0].mxu0 %v696
    %v1792 = vpop.f32.mrb[0].mxu0
    %v1793 = vadd.f32 %v1504, %v1792
    %v1794 = vpop.f32.mrb[0].mxu0
    %v1795 = vpop.f32.mrb[0].mxu0
    %v1796 = vadd.f32 %v1507, %v1795
    %v1797 = vpop.f32.mrb[0].mxu0
    %1798 = vmatprep.mubr.bf16.mxu0 %v705
    %1799 = vmatmul.mubr.bf16.gmra.mrb[0].mxu0 %v704
    %v1800 = vpop.f32.mrb[0].mxu0
    %v1801 = vadd.f32 %v1512, %v1800
    %v1802 = vpop.f32.mrb[0].mxu0
    %v1803 = vpop.f32.mrb[0].mxu0
    %v1804 = vadd.f32 %v1515, %v1803
    %v1805 = vpop.f32.mrb[0].mxu0
    %1806 = vmatprep.mubr.bf16.mxu0 %v713
    %1807 = vmatmul.mubr.bf16.gmra.mrb[0].mxu0 %v712
    %v1808 = vpop.f32.mrb[0].mxu0
    %v1809 = vadd.f32 %v1520, %v1808
    %v1810 = vpop.f32.mrb[0].mxu0
    %v1811 = vpop.f32.mrb[0].mxu0
    %v1812 = vadd.f32 %v1523, %v1811
    %v1813 = vpop.f32.mrb[0].mxu0
    %1814 = vmatprep.mubr.bf16.mxu0 %v721
    %1815 = vmatmul.mubr.bf16.gmra.mrb[0].mxu0 %v720
    %v1816 = vpop.f32.mrb[0].mxu0
    %v1817 = vadd.f32 %v1528, %v1816
    %v1818 = vpop.f32.mrb[0].mxu0
    %v1819 = vpop.f32.mrb[0].mxu0
    %v1820 = vadd.f32 %v1531, %v1819
    %v1821 = vpop.f32.mrb[0].mxu0
    %1822 = vmatprep.mubr.bf16.mxu0 %v729
    %1823 = vmatmul.mubr.bf16.gmra.mrb[0].mxu0 %v728
    %v1824 = vpop.f32.mrb[0].mxu0
    %v1825 = vadd.f32 %v1536, %v1824
    %v1826 = vpop.f32.mrb[0].mxu0
    %v1827 = vpop.f32.mrb[0].mxu0
    %v1828 = vadd.f32 %v1539, %v1827
    %v1829 = vpop.f32.mrb[0].mxu0
    %1830 = vmatprep.mubr.bf16.mxu0 %v737
    %1831 = vmatmul.mubr.bf16.gmra.mrb[0].mxu0 %v736
    %v1832 = vpop.f32.mrb[0].mxu0
    %v1833 = vadd.f32 %v1544, %v1832
    %v1834 = vpop.f32.mrb[0].mxu0
    %v1835 = vpop.f32.mrb[0].mxu0
    %v1836 = vadd.f32 %v1547, %v1835
    %v1837 = vpop.f32.mrb[0].mxu0
    %1838 = vmatprep.mubr.bf16.mxu0 %v745
    %1839 = vmatmul.mubr.bf16.gmra.mrb[0].mxu0 %v744
    %v1840 = vpop.f32.mrb[0].mxu0
    %v1841 = vadd.f32 %v1552, %v1840
    %v1842 = vpop.f32.mrb[0].mxu0
    %v1843 = vpop.f32.mrb[0].mxu0
    %v1844 = vadd.f32 %v1555, %v1843
    %v1845 = vpop.f32.mrb[0].mxu0
    %1846 = vmatprep.mubr.bf16.mxu0 %v753
    %1847 = vmatmul.mubr.bf16.gmra.mrb[0].mxu0 %v752
    %v1848 = vpop.f32.mrb[0].mxu0
    %v1849 = vadd.f32 %v1560, %v1848
    %v1850 = vpop.f32.mrb[0].mxu0
    %v1851 = vpop.f32.mrb[0].mxu0
    %v1852 = vadd.f32 %v1563, %v1851
    %v1853 = vpop.f32.mrb[0].mxu0
    %1854 = vmatprep.mubr.bf16.mxu0 %v761
    %1855 = vmatmul.mubr.bf16.gmra.mrb[0].mxu0 %v760
    %v1856 = vpop.f32.mrb[0].mxu0
    %v1857 = vadd.f32 %v1568, %v1856
    %v1858 = vpop.f32.mrb[0].mxu0
    %v1859 = vpop.f32.mrb[0].mxu0
    %v1860 = vadd.f32 %v1571, %v1859
    %v1861 = vpop.f32.mrb[0].mxu0
    %1862 = vmatprep.mubr.bf16.mxu0 %v769
    %1863 = vmatmul.mubr.bf16.gmra.mrb[0].mxu0 %v768
    %v1864 = vpop.f32.mrb[0].mxu0
    %v1865 = vadd.f32 %v1576, %v1864
    %v1866 = vpop.f32.mrb[0].mxu0
    %v1867 = vpop.f32.mrb[0].mxu0
    %v1868 = vadd.f32 %v1579, %v1867
    %v1869 = vpop.f32.mrb[0].mxu0
    %1870 = vmatprep.mubr.bf16.mxu0 %v777
    %1871 = vmatmul.mubr.bf16.gmra.mrb[0].mxu0 %v776
    %v1872 = vpop.f32.mrb[0].mxu0
    %v1873 = vadd.f32 %v1584, %v1872
    %v1874 = vpop.f32.mrb[0].mxu0
    %v1875 = vpop.f32.mrb[0].mxu0
    %v1876 = vadd.f32 %v1587, %v1875
    %v1877 = vpop.f32.mrb[0].mxu0
    %1878 = vmatprep.mubr.bf16.mxu0 %v785
    %1879 = vmatmul.mubr.bf16.gmra.mrb[0].mxu0 %v784
    %v1880 = vpop.f32.mrb[0].mxu0
    %v1881 = vadd.f32 %v1592, %v1880
    %v1882 = vpop.f32.mrb[0].mxu0
    %v1883 = vpop.f32.mrb[0].mxu0
    %v1884 = vadd.f32 %v1595, %v1883
    %v1885 = vpop.f32.mrb[0].mxu0
    %1886 = vmatprep.mubr.bf16.mxu0 %v793
    %1887 = vmatmul.mubr.bf16.gmra.mrb[0].mxu0 %v792
    %v1888 = vpop.f32.mrb[0].mxu0
    %v1889 = vadd.f32 %v1600, %v1888
    %v1890 = vpop.f32.mrb[0].mxu0
    %v1891 = vpop.f32.mrb[0].mxu0
    %v1892 = vadd.f32 %v1603, %v1891
    %v1893 = vpop.f32.mrb[0].mxu0
    %1894 = vmatprep.mubr.bf16.mxu0 %v801
    %1895 = vmatmul.mubr.bf16.gmra.mrb[0].mxu0 %v800
    %v1896 = vpop.f32.mrb[0].mxu0
    %v1897 = vadd.f32 %v1608, %v1896
    %v1898 = vpop.f32.mrb[0].mxu0
    %v1899 = vpop.f32.mrb[0].mxu0
    %v1900 = vadd.f32 %v1611, %v1899
    %v1901 = vpop.f32.mrb[0].mxu0
    %1902 = vmatprep.mubr.bf16.mxu0 %v809
    %1903 = vmatmul.mubr.bf16.gmra.mrb[0].mxu0 %v808
    %v1904 = vpop.f32.mrb[0].mxu0
    %v1905 = vadd.f32 %v1616, %v1904
    %v1906 = vpop.f32.mrb[0].mxu0
    %v1907 = vpop.f32.mrb[0].mxu0
    %v1908 = vadd.f32 %v1619, %v1907
    %v1909 = vpop.f32.mrb[0].mxu0
    %1910 = vmatprep.mubr.bf16.mxu0 %v817
    %1911 = vmatmul.mubr.bf16.gmra.mrb[0].mxu0 %v816
    %v1912 = vpop.f32.mrb[0].mxu0
    %v1913 = vadd.f32 %v1624, %v1912
    %v1914 = vpop.f32.mrb[0].mxu0
    %v1915 = vpop.f32.mrb[0].mxu0
    %v1916 = vadd.f32 %v1627, %v1915
    %v1917 = vpop.f32.mrb[0].mxu0
    %1918 = vdwg.mxu0
    %1919 = vmatprep.subr.bf16.mxu0 0
    %1920 = vmatpush1.bf16.msra.mxu0 %v1245
    %1921 = vmatprep.subr.bf16.mxu0 0
    %1922 = vmatpush1.bf16.msra.mxu0 %v1246
    %1923 = vmatprep.subr.bf16.mxu0 0
    %1924 = vmatpush1.bf16.msra.mxu0 %v1247
    %1925 = vmatprep.subr.bf16.mxu0 0
    %1926 = vmatpush1.bf16.msra.mxu0 %v1248
    %1927 = vmatprep.subr.bf16.mxu0 0
    %1928 = vmatpush1.bf16.msra.mxu0 %v1249
    %1929 = vmatprep.subr.bf16.mxu0 0
    %1930 = vmatpush1.bf16.msra.mxu0 %v1250
    %1931 = vmatprep.subr.bf16.mxu0 0
    %1932 = vmatpush1.bf16.msra.mxu0 %v1251
    %1933 = vmatprep.subr.bf16.mxu0 0
    %1934 = vmatpush1.bf16.msra.mxu0 %v1252
    %1935 = vmatprep.subr.bf16.mxu0 0
    %1936 = vmatpush1.bf16.msra.mxu0 %v1253
    %1937 = vmatprep.subr.bf16.mxu0 0
    %1938 = vmatpush1.bf16.msra.mxu0 %v1254
    %1939 = vmatprep.subr.bf16.mxu0 0
    %1940 = vmatpush1.bf16.msra.mxu0 %v1255
    %1941 = vmatprep.subr.bf16.mxu0 0
    %1942 = vmatpush1.bf16.msra.mxu0 %v1256
    %1943 = vmatprep.subr.bf16.mxu0 0
    %1944 = vmatpush1.bf16.msra.mxu0 %v1257
    %1945 = vmatprep.subr.bf16.mxu0 0
    %1946 = vmatpush1.bf16.msra.mxu0 %v1258
    %1947 = vmatprep.subr.bf16.mxu0 0
    %1948 = vmatpush1.bf16.msra.mxu0 %v1259
    %1949 = vmatprep.subr.bf16.mxu0 0
    %1950 = vmatpush1.bf16.msra.mxu0 %v1260
    %1951 = vmatprep.mubr.bf16.mxu0 %v571
    %1952 = vmatmul.mubr.bf16.gmra.mrb[0].mxu0 %v570
    %v1953 = vpop.f32.mrb[0].mxu0
    %v1954 = vadd.f32 %v1665, %v1953
    %v1955 = vpop.f32.mrb[0].mxu0
    %v1956 = vpop.f32.mrb[0].mxu0
    %v1957 = vadd.f32 %v1668, %v1956
    %v1958 = vpop.f32.mrb[0].mxu0
    %1959 = vmatprep.mubr.bf16.mxu0 %v579
    %1960 = vmatmul.mubr.bf16.gmra.mrb[0].mxu0 %v578
    %v1961 = vpop.f32.mrb[0].mxu0
    %v1962 = vadd.f32 %v1673, %v1961
    %v1963 = vpop.f32.mrb[0].mxu0
    %v1964 = vpop.f32.mrb[0].mxu0
    %v1965 = vadd.f32 %v1676, %v1964
    %v1966 = vpop.f32.mrb[0].mxu0
    %1967 = vmatprep.mubr.bf16.mxu0 %v587
    %1968 = vmatmul.mubr.bf16.gmra.mrb[0].mxu0 %v586
    %v1969 = vpop.f32.mrb[0].mxu0
    %v1970 = vadd.f32 %v1681, %v1969
    %v1971 = vpop.f32.mrb[0].mxu0
    %v1972 = vpop.f32.mrb[0].mxu0
    %v1973 = vadd.f32 %v1684, %v1972
    %v1974 = vpop.f32.mrb[0].mxu0
    %1975 = vmatprep.mubr.bf16.mxu0 %v595
    %1976 = vmatmul.mubr.bf16.gmra.mrb[0].mxu0 %v594
    %v1977 = vpop.f32.mrb[0].mxu0
    %v1978 = vadd.f32 %v1689, %v1977
    %v1979 = vpop.f32.mrb[0].mxu0
    %v1980 = vpop.f32.mrb[0].mxu0
    %v1981 = vadd.f32 %v1692, %v1980
    %v1982 = vpop.f32.mrb[0].mxu0
    %1983 = vmatprep.mubr.bf16.mxu0 %v603
    %1984 = vmatmul.mubr.bf16.gmra.mrb[0].mxu0 %v602
    %v1985 = vpop.f32.mrb[0].mxu0
    %v1986 = vadd.f32 %v1697, %v1985
    %v1987 = vpop.f32.mrb[0].mxu0
    %v1988 = vpop.f32.mrb[0].mxu0
    %v1989 = vadd.f32 %v1700, %v1988
    %v1990 = vpop.f32.mrb[0].mxu0
    %1991 = vmatprep.mubr.bf16.mxu0 %v611
    %1992 = vmatmul.mubr.bf16.gmra.mrb[0].mxu0 %v610
    %v1993 = vpop.f32.mrb[0].mxu0
    %v1994 = vadd.f32 %v1705, %v1993
    %v1995 = vpop.f32.mrb[0].mxu0
    %v1996 = vpop.f32.mrb[0].mxu0
    %v1997 = vadd.f32 %v1708, %v1996
    %v1998 = vpop.f32.mrb[0].mxu0
    %1999 = vmatprep.mubr.bf16.mxu0 %v619
    %2000 = vmatmul.mubr.bf16.gmra.mrb[0].mxu0 %v618
    %v2001 = vpop.f32.mrb[0].mxu0
    %v2002 = vadd.f32 %v1713, %v2001
    %v2003 = vpop.f32.mrb[0].mxu0
    %v2004 = vpop.f32.mrb[0].mxu0
    %v2005 = vadd.f32 %v1716, %v2004
    %v2006 = vpop.f32.mrb[0].mxu0
    %2007 = vmatprep.mubr.bf16.mxu0 %v627
    %2008 = vmatmul.mubr.bf16.gmra.mrb[0].mxu0 %v626
    %v2009 = vpop.f32.mrb[0].mxu0
    %v2010 = vadd.f32 %v1721, %v2009
    %v2011 = vpop.f32.mrb[0].mxu0
    %v2012 = vpop.f32.mrb[0].mxu0
    %v2013 = vadd.f32 %v1724, %v2012
    %v2014 = vpop.f32.mrb[0].mxu0
    %2015 = vmatprep.mubr.bf16.mxu0 %v635
    %2016 = vmatmul.mubr.bf16.gmra.mrb[0].mxu0 %v634
    %v2017 = vpop.f32.mrb[0].mxu0
    %v2018 = vadd.f32 %v1729, %v2017
    %v2019 = vpop.f32.mrb[0].mxu0
    %v2020 = vpop.f32.mrb[0].mxu0
    %v2021 = vadd.f32 %v1732, %v2020
    %v2022 = vpop.f32.mrb[0].mxu0
    %2023 = vmatprep.mubr.bf16.mxu0 %v643
    %2024 = vmatmul.mubr.bf16.gmra.mrb[0].mxu0 %v642
    %v2025 = vpop.f32.mrb[0].mxu0
    %v2026 = vadd.f32 %v1737, %v2025
    %v2027 = vpop.f32.mrb[0].mxu0
    %v2028 = vpop.f32.mrb[0].mxu0
    %v2029 = vadd.f32 %v1740, %v2028
    %v2030 = vpop.f32.mrb[0].mxu0
    %2031 = vmatprep.mubr.bf16.mxu0 %v651
    %2032 = vmatmul.mubr.bf16.gmra.mrb[0].mxu0 %v650
    %v2033 = vpop.f32.mrb[0].mxu0
    %v2034 = vadd.f32 %v1745, %v2033
    %v2035 = vpop.f32.mrb[0].mxu0
    %v2036 = vpop.f32.mrb[0].mxu0
    %v2037 = vadd.f32 %v1748, %v2036
    %v2038 = vpop.f32.mrb[0].mxu0
    %2039 = vmatprep.mubr.bf16.mxu0 %v659
    %2040 = vmatmul.mubr.bf16.gmra.mrb[0].mxu0 %v658
    %v2041 = vpop.f32.mrb[0].mxu0
    %v2042 = vadd.f32 %v1753, %v2041
    %v2043 = vpop.f32.mrb[0].mxu0
    %v2044 = vpop.f32.mrb[0].mxu0
    %v2045 = vadd.f32 %v1756, %v2044
    %v2046 = vpop.f32.mrb[0].mxu0
    %2047 = vmatprep.mubr.bf16.mxu0 %v667
    %2048 = vmatmul.mubr.bf16.gmra.mrb[0].mxu0 %v666
    %v2049 = vpop.f32.mrb[0].mxu0
    %v2050 = vadd.f32 %v1761, %v2049
    %v2051 = vpop.f32.mrb[0].mxu0
    %v2052 = vpop.f32.mrb[0].mxu0
    %v2053 = vadd.f32 %v1764, %v2052
    %v2054 = vpop.f32.mrb[0].mxu0
    %2055 = vmatprep.mubr.bf16.mxu0 %v675
    %2056 = vmatmul.mubr.bf16.gmra.mrb[0].mxu0 %v674
    %v2057 = vpop.f32.mrb[0].mxu0
    %v2058 = vadd.f32 %v1769, %v2057
    %v2059 = vpop.f32.mrb[0].mxu0
    %v2060 = vpop.f32.mrb[0].mxu0
    %v2061 = vadd.f32 %v1772, %v2060
    %v2062 = vpop.f32.mrb[0].mxu0
    %2063 = vmatprep.mubr.bf16.mxu0 %v683
    %2064 = vmatmul.mubr.bf16.gmra.mrb[0].mxu0 %v682
    %v2065 = vpop.f32.mrb[0].mxu0
    %v2066 = vadd.f32 %v1777, %v2065
    %v2067 = vpop.f32.mrb[0].mxu0
    %v2068 = vpop.f32.mrb[0].mxu0
    %v2069 = vadd.f32 %v1780, %v2068
    %v2070 = vpop.f32.mrb[0].mxu0
    %2071 = vmatprep.mubr.bf16.mxu0 %v691
    %2072 = vmatmul.mubr.bf16.gmra.mrb[0].mxu0 %v690
    %v2073 = vpop.f32.mrb[0].mxu0
    %v2074 = vadd.f32 %v1785, %v2073
    %v2075 = vpop.f32.mrb[0].mxu0
    %v2076 = vpop.f32.mrb[0].mxu0
    %v2077 = vadd.f32 %v1788, %v2076
    %v2078 = vpop.f32.mrb[0].mxu0
    %2079 = vmatprep.mubr.bf16.mxu0 %v699
    %2080 = vmatmul.mubr.bf16.gmra.mrb[0].mxu0 %v698
    %v2081 = vpop.f32.mrb[0].mxu0
    %v2082 = vadd.f32 %v1793, %v2081
    %v2083 = vpop.f32.mrb[0].mxu0
    %v2084 = vpop.f32.mrb[0].mxu0
    %v2085 = vadd.f32 %v1796, %v2084
    %v2086 = vpop.f32.mrb[0].mxu0
    %2087 = vmatprep.mubr.bf16.mxu0 %v707
    %2088 = vmatmul.mubr.bf16.gmra.mrb[0].mxu0 %v706
    %v2089 = vpop.f32.mrb[0].mxu0
    %v2090 = vadd.f32 %v1801, %v2089
    %v2091 = vpop.f32.mrb[0].mxu0
    %v2092 = vpop.f32.mrb[0].mxu0
    %v2093 = vadd.f32 %v1804, %v2092
    %v2094 = vpop.f32.mrb[0].mxu0
    %2095 = vmatprep.mubr.bf16.mxu0 %v715
    %2096 = vmatmul.mubr.bf16.gmra.mrb[0].mxu0 %v714
    %v2097 = vpop.f32.mrb[0].mxu0
    %v2098 = vadd.f32 %v1809, %v2097
    %v2099 = vpop.f32.mrb[0].mxu0
    %v2100 = vpop.f32.mrb[0].mxu0
    %v2101 = vadd.f32 %v1812, %v2100
    %v2102 = vpop.f32.mrb[0].mxu0
    %2103 = vmatprep.mubr.bf16.mxu0 %v723
    %2104 = vmatmul.mubr.bf16.gmra.mrb[0].mxu0 %v722
    %v2105 = vpop.f32.mrb[0].mxu0
    %v2106 = vadd.f32 %v1817, %v2105
    %v2107 = vpop.f32.mrb[0].mxu0
    %v2108 = vpop.f32.mrb[0].mxu0
    %v2109 = vadd.f32 %v1820, %v2108
    %v2110 = vpop.f32.mrb[0].mxu0
    %2111 = vmatprep.mubr.bf16.mxu0 %v731
    %2112 = vmatmul.mubr.bf16.gmra.mrb[0].mxu0 %v730
    %v2113 = vpop.f32.mrb[0].mxu0
    %v2114 = vadd.f32 %v1825, %v2113
    %v2115 = vpop.f32.mrb[0].mxu0
    %v2116 = vpop.f32.mrb[0].mxu0
    %v2117 = vadd.f32 %v1828, %v2116
    %v2118 = vpop.f32.mrb[0].mxu0
    %2119 = vmatprep.mubr.bf16.mxu0 %v739
    %2120 = vmatmul.mubr.bf16.gmra.mrb[0].mxu0 %v738
    %v2121 = vpop.f32.mrb[0].mxu0
    %v2122 = vadd.f32 %v1833, %v2121
    %v2123 = vpop.f32.mrb[0].mxu0
    %v2124 = vpop.f32.mrb[0].mxu0
    %v2125 = vadd.f32 %v1836, %v2124
    %v2126 = vpop.f32.mrb[0].mxu0
    %2127 = vmatprep.mubr.bf16.mxu0 %v747
    %2128 = vmatmul.mubr.bf16.gmra.mrb[0].mxu0 %v746
    %v2129 = vpop.f32.mrb[0].mxu0
    %v2130 = vadd.f32 %v1841, %v2129
    %v2131 = vpop.f32.mrb[0].mxu0
    %v2132 = vpop.f32.mrb[0].mxu0
    %v2133 = vadd.f32 %v1844, %v2132
    %v2134 = vpop.f32.mrb[0].mxu0
    %2135 = vmatprep.mubr.bf16.mxu0 %v755
    %2136 = vmatmul.mubr.bf16.gmra.mrb[0].mxu0 %v754
    %v2137 = vpop.f32.mrb[0].mxu0
    %v2138 = vadd.f32 %v1849, %v2137
    %v2139 = vpop.f32.mrb[0].mxu0
    %v2140 = vpop.f32.mrb[0].mxu0
    %v2141 = vadd.f32 %v1852, %v2140
    %v2142 = vpop.f32.mrb[0].mxu0
    %2143 = vmatprep.mubr.bf16.mxu0 %v763
    %2144 = vmatmul.mubr.bf16.gmra.mrb[0].mxu0 %v762
    %v2145 = vpop.f32.mrb[0].mxu0
    %v2146 = vadd.f32 %v1857, %v2145
    %v2147 = vpop.f32.mrb[0].mxu0
    %v2148 = vpop.f32.mrb[0].mxu0
    %v2149 = vadd.f32 %v1860, %v2148
    %v2150 = vpop.f32.mrb[0].mxu0
    %2151 = vmatprep.mubr.bf16.mxu0 %v771
    %2152 = vmatmul.mubr.bf16.gmra.mrb[0].mxu0 %v770
    %v2153 = vpop.f32.mrb[0].mxu0
    %v2154 = vadd.f32 %v1865, %v2153
    %v2155 = vpop.f32.mrb[0].mxu0
    %v2156 = vpop.f32.mrb[0].mxu0
    %v2157 = vadd.f32 %v1868, %v2156
    %v2158 = vpop.f32.mrb[0].mxu0
    %2159 = vmatprep.mubr.bf16.mxu0 %v779
    %2160 = vmatmul.mubr.bf16.gmra.mrb[0].mxu0 %v778
    %v2161 = vpop.f32.mrb[0].mxu0
    %v2162 = vadd.f32 %v1873, %v2161
    %v2163 = vpop.f32.mrb[0].mxu0
    %v2164 = vpop.f32.mrb[0].mxu0
    %v2165 = vadd.f32 %v1876, %v2164
    %v2166 = vpop.f32.mrb[0].mxu0
    %2167 = vmatprep.mubr.bf16.mxu0 %v787
    %2168 = vmatmul.mubr.bf16.gmra.mrb[0].mxu0 %v786
    %v2169 = vpop.f32.mrb[0].mxu0
    %v2170 = vadd.f32 %v1881, %v2169
    %v2171 = vpop.f32.mrb[0].mxu0
    %v2172 = vpop.f32.mrb[0].mxu0
    %v2173 = vadd.f32 %v1884, %v2172
    %v2174 = vpop.f32.mrb[0].mxu0
    %2175 = vmatprep.mubr.bf16.mxu0 %v795
    %2176 = vmatmul.mubr.bf16.gmra.mrb[0].mxu0 %v794
    %v2177 = vpop.f32.mrb[0].mxu0
    %v2178 = vadd.f32 %v1889, %v2177
    %v2179 = vpop.f32.mrb[0].mxu0
    %v2180 = vpop.f32.mrb[0].mxu0
    %v2181 = vadd.f32 %v1892, %v2180
    %v2182 = vpop.f32.mrb[0].mxu0
    %2183 = vmatprep.mubr.bf16.mxu0 %v803
    %2184 = vmatmul.mubr.bf16.gmra.mrb[0].mxu0 %v802
    %v2185 = vpop.f32.mrb[0].mxu0
    %v2186 = vadd.f32 %v1897, %v2185
    %v2187 = vpop.f32.mrb[0].mxu0
    %v2188 = vpop.f32.mrb[0].mxu0
    %v2189 = vadd.f32 %v1900, %v2188
    %v2190 = vpop.f32.mrb[0].mxu0
    %2191 = vmatprep.mubr.bf16.mxu0 %v811
    %2192 = vmatmul.mubr.bf16.gmra.mrb[0].mxu0 %v810
    %v2193 = vpop.f32.mrb[0].mxu0
    %v2194 = vadd.f32 %v1905, %v2193
    %v2195 = vpop.f32.mrb[0].mxu0
    %v2196 = vpop.f32.mrb[0].mxu0
    %v2197 = vadd.f32 %v1908, %v2196
    %v2198 = vpop.f32.mrb[0].mxu0
    %2199 = vmatprep.mubr.bf16.mxu0 %v819
    %2200 = vmatmul.mubr.bf16.gmra.mrb[0].mxu0 %v818
    %v2201 = vpop.f32.mrb[0].mxu0
    %v2202 = vadd.f32 %v1913, %v2201
    %v2203 = vpop.f32.mrb[0].mxu0
    %v2204 = vpop.f32.mrb[0].mxu0
    %v2205 = vadd.f32 %v1916, %v2204
    %v2206 = vpop.f32.mrb[0].mxu0
    %2207 = vdwg.mxu0
    %2208 = vmatprep.subr.bf16.mxu0 0
    %2209 = vmatpush1.bf16.msra.mxu0 %v1261
    %2210 = vmatprep.subr.bf16.mxu0 0
    %2211 = vmatpush1.bf16.msra.mxu0 %v1262
    %2212 = vmatprep.subr.bf16.mxu0 0
    %2213 = vmatpush1.bf16.msra.mxu0 %v1263
    %2214 = vmatprep.subr.bf16.mxu0 0
    %2215 = vmatpush1.bf16.msra.mxu0 %v1264
    %2216 = vmatprep.subr.bf16.mxu0 0
    %2217 = vmatpush1.bf16.msra.mxu0 %v1265
    %2218 = vmatprep.subr.bf16.mxu0 0
    %2219 = vmatpush1.bf16.msra.mxu0 %v1266
    %2220 = vmatprep.subr.bf16.mxu0 0
    %2221 = vmatpush1.bf16.msra.mxu0 %v1267
    %2222 = vmatprep.subr.bf16.mxu0 0
    %2223 = vmatpush1.bf16.msra.mxu0 %v1268
    %2224 = vmatprep.subr.bf16.mxu0 0
    %2225 = vmatpush1.bf16.msra.mxu0 %v1269
    %2226 = vmatprep.subr.bf16.mxu0 0
    %2227 = vmatpush1.bf16.msra.mxu0 %v1270
    %2228 = vmatprep.subr.bf16.mxu0 0
    %2229 = vmatpush1.bf16.msra.mxu0 %v1271
    %2230 = vmatprep.subr.bf16.mxu0 0
    %2231 = vmatpush1.bf16.msra.mxu0 %v1272
    %2232 = vmatprep.subr.bf16.mxu0 0
    %2233 = vmatpush1.bf16.msra.mxu0 %v1273
    %2234 = vmatprep.subr.bf16.mxu0 0
    %2235 = vmatpush1.bf16.msra.mxu0 %v1274
    %2236 = vmatprep.subr.bf16.mxu0 0
    %2237 = vmatpush1.bf16.msra.mxu0 %v1275
    %2238 = vmatprep.subr.bf16.mxu0 0
    %2239 = vmatpush1.bf16.msra.mxu0 %v1276
    %2240 = vmatprep.mubr.bf16.mxu0 %v573
    %2241 = vmatmul.mubr.bf16.gmra.mrb[0].mxu0 %v572
    %v2242 = vpop.f32.mrb[0].mxu0
    %v2243 = vadd.f32 %v1954, %v2242
    %v2244 = vpop.f32.mrb[0].mxu0
    %v2245 = vpop.f32.mrb[0].mxu0
    %v2246 = vadd.f32 %v1957, %v2245
    %v2247 = vpop.f32.mrb[0].mxu0
    %2248 = vmatprep.mubr.bf16.mxu0 %v581
    %2249 = vmatmul.mubr.bf16.gmra.mrb[0].mxu0 %v580
    %v2250 = vpop.f32.mrb[0].mxu0
    %v2251 = vadd.f32 %v1962, %v2250
    %v2252 = vpop.f32.mrb[0].mxu0
    %v2253 = vpop.f32.mrb[0].mxu0
    %v2254 = vadd.f32 %v1965, %v2253
    %v2255 = vpop.f32.mrb[0].mxu0
    %2256 = vmatprep.mubr.bf16.mxu0 %v589
    %2257 = vmatmul.mubr.bf16.gmra.mrb[0].mxu0 %v588
    %v2258 = vpop.f32.mrb[0].mxu0
    %v2259 = vadd.f32 %v1970, %v2258
    %v2260 = vpop.f32.mrb[0].mxu0
    %v2261 = vpop.f32.mrb[0].mxu0
    %v2262 = vadd.f32 %v1973, %v2261
    %v2263 = vpop.f32.mrb[0].mxu0
    %2264 = vmatprep.mubr.bf16.mxu0 %v597
    %2265 = vmatmul.mubr.bf16.gmra.mrb[0].mxu0 %v596
    %v2266 = vpop.f32.mrb[0].mxu0
    %v2267 = vadd.f32 %v1978, %v2266
    %v2268 = vpop.f32.mrb[0].mxu0
    %v2269 = vpop.f32.mrb[0].mxu0
    %v2270 = vadd.f32 %v1981, %v2269
    %v2271 = vpop.f32.mrb[0].mxu0
    %2272 = vmatprep.mubr.bf16.mxu0 %v605
    %2273 = vmatmul.mubr.bf16.gmra.mrb[0].mxu0 %v604
    %v2274 = vpop.f32.mrb[0].mxu0
    %v2275 = vadd.f32 %v1986, %v2274
    %v2276 = vpop.f32.mrb[0].mxu0
    %v2277 = vpop.f32.mrb[0].mxu0
    %v2278 = vadd.f32 %v1989, %v2277
    %v2279 = vpop.f32.mrb[0].mxu0
    %2280 = vmatprep.mubr.bf16.mxu0 %v613
    %2281 = vmatmul.mubr.bf16.gmra.mrb[0].mxu0 %v612
    %v2282 = vpop.f32.mrb[0].mxu0
    %v2283 = vadd.f32 %v1994, %v2282
    %v2284 = vpop.f32.mrb[0].mxu0
    %v2285 = vpop.f32.mrb[0].mxu0
    %v2286 = vadd.f32 %v1997, %v2285
    %v2287 = vpop.f32.mrb[0].mxu0
    %2288 = vmatprep.mubr.bf16.mxu0 %v621
    %2289 = vmatmul.mubr.bf16.gmra.mrb[0].mxu0 %v620
    %v2290 = vpop.f32.mrb[0].mxu0
    %v2291 = vadd.f32 %v2002, %v2290
    %v2292 = vpop.f32.mrb[0].mxu0
    %v2293 = vpop.f32.mrb[0].mxu0
    %v2294 = vadd.f32 %v2005, %v2293
    %v2295 = vpop.f32.mrb[0].mxu0
    %2296 = vmatprep.mubr.bf16.mxu0 %v629
    %2297 = vmatmul.mubr.bf16.gmra.mrb[0].mxu0 %v628
    %v2298 = vpop.f32.mrb[0].mxu0
    %v2299 = vadd.f32 %v2010, %v2298
    %v2300 = vpop.f32.mrb[0].mxu0
    %v2301 = vpop.f32.mrb[0].mxu0
    %v2302 = vadd.f32 %v2013, %v2301
    %v2303 = vpop.f32.mrb[0].mxu0
    %2304 = vmatprep.mubr.bf16.mxu0 %v637
    %2305 = vmatmul.mubr.bf16.gmra.mrb[0].mxu0 %v636
    %v2306 = vpop.f32.mrb[0].mxu0
    %v2307 = vadd.f32 %v2018, %v2306
    %v2308 = vpop.f32.mrb[0].mxu0
    %v2309 = vpop.f32.mrb[0].mxu0
    %v2310 = vadd.f32 %v2021, %v2309
    %v2311 = vpop.f32.mrb[0].mxu0
    %2312 = vmatprep.mubr.bf16.mxu0 %v645
    %2313 = vmatmul.mubr.bf16.gmra.mrb[0].mxu0 %v644
    %v2314 = vpop.f32.mrb[0].mxu0
    %v2315 = vadd.f32 %v2026, %v2314
    %v2316 = vpop.f32.mrb[0].mxu0
    %v2317 = vpop.f32.mrb[0].mxu0
    %v2318 = vadd.f32 %v2029, %v2317
    %v2319 = vpop.f32.mrb[0].mxu0
    %2320 = vmatprep.mubr.bf16.mxu0 %v653
    %2321 = vmatmul.mubr.bf16.gmra.mrb[0].mxu0 %v652
    %v2322 = vpop.f32.mrb[0].mxu0
    %v2323 = vadd.f32 %v2034, %v2322
    %v2324 = vpop.f32.mrb[0].mxu0
    %v2325 = vpop.f32.mrb[0].mxu0
    %v2326 = vadd.f32 %v2037, %v2325
    %v2327 = vpop.f32.mrb[0].mxu0
    %2328 = vmatprep.mubr.bf16.mxu0 %v661
    %2329 = vmatmul.mubr.bf16.gmra.mrb[0].mxu0 %v660
    %v2330 = vpop.f32.mrb[0].mxu0
    %v2331 = vadd.f32 %v2042, %v2330
    %v2332 = vpop.f32.mrb[0].mxu0
    %v2333 = vpop.f32.mrb[0].mxu0
    %v2334 = vadd.f32 %v2045, %v2333
    %v2335 = vpop.f32.mrb[0].mxu0
    %2336 = vmatprep.mubr.bf16.mxu0 %v669
    %2337 = vmatmul.mubr.bf16.gmra.mrb[0].mxu0 %v668
    %v2338 = vpop.f32.mrb[0].mxu0
    %v2339 = vadd.f32 %v2050, %v2338
    %v2340 = vpop.f32.mrb[0].mxu0
    %v2341 = vpop.f32.mrb[0].mxu0
    %v2342 = vadd.f32 %v2053, %v2341
    %v2343 = vpop.f32.mrb[0].mxu0
    %2344 = vmatprep.mubr.bf16.mxu0 %v677
    %2345 = vmatmul.mubr.bf16.gmra.mrb[0].mxu0 %v676
    %v2346 = vpop.f32.mrb[0].mxu0
    %v2347 = vadd.f32 %v2058, %v2346
    %v2348 = vpop.f32.mrb[0].mxu0
    %v2349 = vpop.f32.mrb[0].mxu0
    %v2350 = vadd.f32 %v2061, %v2349
    %v2351 = vpop.f32.mrb[0].mxu0
    %2352 = vmatprep.mubr.bf16.mxu0 %v685
    %2353 = vmatmul.mubr.bf16.gmra.mrb[0].mxu0 %v684
    %v2354 = vpop.f32.mrb[0].mxu0
    %v2355 = vadd.f32 %v2066, %v2354
    %v2356 = vpop.f32.mrb[0].mxu0
    %v2357 = vpop.f32.mrb[0].mxu0
    %v2358 = vadd.f32 %v2069, %v2357
    %v2359 = vpop.f32.mrb[0].mxu0
    %2360 = vmatprep.mubr.bf16.mxu0 %v693
    %2361 = vmatmul.mubr.bf16.gmra.mrb[0].mxu0 %v692
    %v2362 = vpop.f32.mrb[0].mxu0
    %v2363 = vadd.f32 %v2074, %v2362
    %v2364 = vpop.f32.mrb[0].mxu0
    %v2365 = vpop.f32.mrb[0].mxu0
    %v2366 = vadd.f32 %v2077, %v2365
    %v2367 = vpop.f32.mrb[0].mxu0
    %2368 = vmatprep.mubr.bf16.mxu0 %v701
    %2369 = vmatmul.mubr.bf16.gmra.mrb[0].mxu0 %v700
    %v2370 = vpop.f32.mrb[0].mxu0
    %v2371 = vadd.f32 %v2082, %v2370
    %v2372 = vpop.f32.mrb[0].mxu0
    %v2373 = vpop.f32.mrb[0].mxu0
    %v2374 = vadd.f32 %v2085, %v2373
    %v2375 = vpop.f32.mrb[0].mxu0
    %2376 = vmatprep.mubr.bf16.mxu0 %v709
    %2377 = vmatmul.mubr.bf16.gmra.mrb[0].mxu0 %v708
    %v2378 = vpop.f32.mrb[0].mxu0
    %v2379 = vadd.f32 %v2090, %v2378
    %v2380 = vpop.f32.mrb[0].mxu0
    %v2381 = vpop.f32.mrb[0].mxu0
    %v2382 = vadd.f32 %v2093, %v2381
    %v2383 = vpop.f32.mrb[0].mxu0
    %2384 = vmatprep.mubr.bf16.mxu0 %v717
    %2385 = vmatmul.mubr.bf16.gmra.mrb[0].mxu0 %v716
    %v2386 = vpop.f32.mrb[0].mxu0
    %v2387 = vadd.f32 %v2098, %v2386
    %v2388 = vpop.f32.mrb[0].mxu0
    %v2389 = vpop.f32.mrb[0].mxu0
    %v2390 = vadd.f32 %v2101, %v2389
    %v2391 = vpop.f32.mrb[0].mxu0
    %2392 = vmatprep.mubr.bf16.mxu0 %v725
    %2393 = vmatmul.mubr.bf16.gmra.mrb[0].mxu0 %v724
    %v2394 = vpop.f32.mrb[0].mxu0
    %v2395 = vadd.f32 %v2106, %v2394
    %v2396 = vpop.f32.mrb[0].mxu0
    %v2397 = vpop.f32.mrb[0].mxu0
    %v2398 = vadd.f32 %v2109, %v2397
    %v2399 = vpop.f32.mrb[0].mxu0
    %2400 = vmatprep.mubr.bf16.mxu0 %v733
    %2401 = vmatmul.mubr.bf16.gmra.mrb[0].mxu0 %v732
    %v2402 = vpop.f32.mrb[0].mxu0
    %v2403 = vadd.f32 %v2114, %v2402
    %v2404 = vpop.f32.mrb[0].mxu0
    %v2405 = vpop.f32.mrb[0].mxu0
    %v2406 = vadd.f32 %v2117, %v2405
    %v2407 = vpop.f32.mrb[0].mxu0
    %2408 = vmatprep.mubr.bf16.mxu0 %v741
    %2409 = vmatmul.mubr.bf16.gmra.mrb[0].mxu0 %v740
    %v2410 = vpop.f32.mrb[0].mxu0
    %v2411 = vadd.f32 %v2122, %v2410
    %v2412 = vpop.f32.mrb[0].mxu0
    %v2413 = vpop.f32.mrb[0].mxu0
    %v2414 = vadd.f32 %v2125, %v2413
    %v2415 = vpop.f32.mrb[0].mxu0
    %2416 = vmatprep.mubr.bf16.mxu0 %v749
    %2417 = vmatmul.mubr.bf16.gmra.mrb[0].mxu0 %v748
    %v2418 = vpop.f32.mrb[0].mxu0
    %v2419 = vadd.f32 %v2130, %v2418
    %v2420 = vpop.f32.mrb[0].mxu0
    %v2421 = vpop.f32.mrb[0].mxu0
    %v2422 = vadd.f32 %v2133, %v2421
    %v2423 = vpop.f32.mrb[0].mxu0
    %2424 = vmatprep.mubr.bf16.mxu0 %v757
    %2425 = vmatmul.mubr.bf16.gmra.mrb[0].mxu0 %v756
    %v2426 = vpop.f32.mrb[0].mxu0
    %v2427 = vadd.f32 %v2138, %v2426
    %v2428 = vpop.f32.mrb[0].mxu0
    %v2429 = vpop.f32.mrb[0].mxu0
    %v2430 = vadd.f32 %v2141, %v2429
    %v2431 = vpop.f32.mrb[0].mxu0
    %2432 = vmatprep.mubr.bf16.mxu0 %v765
    %2433 = vmatmul.mubr.bf16.gmra.mrb[0].mxu0 %v764
    %v2434 = vpop.f32.mrb[0].mxu0
    %v2435 = vadd.f32 %v2146, %v2434
    %v2436 = vpop.f32.mrb[0].mxu0
    %v2437 = vpop.f32.mrb[0].mxu0
    %v2438 = vadd.f32 %v2149, %v2437
    %v2439 = vpop.f32.mrb[0].mxu0
    %2440 = vmatprep.mubr.bf16.mxu0 %v773
    %2441 = vmatmul.mubr.bf16.gmra.mrb[0].mxu0 %v772
    %v2442 = vpop.f32.mrb[0].mxu0
    %v2443 = vadd.f32 %v2154, %v2442
    %v2444 = vpop.f32.mrb[0].mxu0
    %v2445 = vpop.f32.mrb[0].mxu0
    %v2446 = vadd.f32 %v2157, %v2445
    %v2447 = vpop.f32.mrb[0].mxu0
    %2448 = vmatprep.mubr.bf16.mxu0 %v781
    %2449 = vmatmul.mubr.bf16.gmra.mrb[0].mxu0 %v780
    %v2450 = vpop.f32.mrb[0].mxu0
    %v2451 = vadd.f32 %v2162, %v2450
    %v2452 = vpop.f32.mrb[0].mxu0
    %v2453 = vpop.f32.mrb[0].mxu0
    %v2454 = vadd.f32 %v2165, %v2453
    %v2455 = vpop.f32.mrb[0].mxu0
    %2456 = vmatprep.mubr.bf16.mxu0 %v789
    %2457 = vmatmul.mubr.bf16.gmra.mrb[0].mxu0 %v788
    %v2458 = vpop.f32.mrb[0].mxu0
    %v2459 = vadd.f32 %v2170, %v2458
    %v2460 = vpop.f32.mrb[0].mxu0
    %v2461 = vpop.f32.mrb[0].mxu0
    %v2462 = vadd.f32 %v2173, %v2461
    %v2463 = vpop.f32.mrb[0].mxu0
    %2464 = vmatprep.mubr.bf16.mxu0 %v797
    %2465 = vmatmul.mubr.bf16.gmra.mrb[0].mxu0 %v796
    %v2466 = vpop.f32.mrb[0].mxu0
    %v2467 = vadd.f32 %v2178, %v2466
    %v2468 = vpop.f32.mrb[0].mxu0
    %v2469 = vpop.f32.mrb[0].mxu0
    %v2470 = vadd.f32 %v2181, %v2469
    %v2471 = vpop.f32.mrb[0].mxu0
    %2472 = vmatprep.mubr.bf16.mxu0 %v805
    %2473 = vmatmul.mubr.bf16.gmra.mrb[0].mxu0 %v804
    %v2474 = vpop.f32.mrb[0].mxu0
    %v2475 = vadd.f32 %v2186, %v2474
    %v2476 = vpop.f32.mrb[0].mxu0
    %v2477 = vpop.f32.mrb[0].mxu0
    %v2478 = vadd.f32 %v2189, %v2477
    %v2479 = vpop.f32.mrb[0].mxu0
    %2480 = vmatprep.mubr.bf16.mxu0 %v813
    %2481 = vmatmul.mubr.bf16.gmra.mrb[0].mxu0 %v812
    %v2482 = vpop.f32.mrb[0].mxu0
    %v2483 = vadd.f32 %v2194, %v2482
    %v2484 = vpop.f32.mrb[0].mxu0
    %v2485 = vpop.f32.mrb[0].mxu0
    %v2486 = vadd.f32 %v2197, %v2485
    %v2487 = vpop.f32.mrb[0].mxu0
    %2488 = vmatprep.mubr.bf16.mxu0 %v821
    %2489 = vmatmul.mubr.bf16.gmra.mrb[0].mxu0 %v820
    %v2490 = vpop.f32.mrb[0].mxu0
    %v2491 = vadd.f32 %v2202, %v2490
    %v2492 = vpop.f32.mrb[0].mxu0
    %v2493 = vpop.f32.mrb[0].mxu0
    %v2494 = vadd.f32 %v2205, %v2493
    %v2495 = vpop.f32.mrb[0].mxu0
    %2496 = vdwg.mxu0
    %vm2497 = vcmp.gt.f32.partialorder %v2243, 0.0
    %vm2498 = vcmp.gt.f32.partialorder %v2246, 0.0
    %vm2499 = vcmp.gt.f32.partialorder %v2251, 0.0
    %vm2500 = vcmp.gt.f32.partialorder %v2254, 0.0
    %vm2501 = vcmp.gt.f32.partialorder %v2259, 0.0
    %vm2502 = vcmp.gt.f32.partialorder %v2262, 0.0
    %vm2503 = vcmp.gt.f32.partialorder %v2267, 0.0
    %vm2504 = vcmp.gt.f32.partialorder %v2270, 0.0
    %vm2505 = vcmp.gt.f32.partialorder %v2275, 0.0
    %vm2506 = vcmp.gt.f32.partialorder %v2278, 0.0
    %vm2507 = vcmp.gt.f32.partialorder %v2283, 0.0
    %vm2508 = vcmp.gt.f32.partialorder %v2286, 0.0
    %vm2509 = vcmp.gt.f32.partialorder %v2291, 0.0
    %vm2510 = vcmp.gt.f32.partialorder %v2294, 0.0
    %vm2511 = vcmp.gt.f32.partialorder %v2299, 0.0
    %vm2512 = vcmp.gt.f32.partialorder %v2302, 0.0
    %vm2513 = vcmp.gt.f32.partialorder %v2307, 0.0
    %vm2514 = vcmp.gt.f32.partialorder %v2310, 0.0
    %vm2515 = vcmp.gt.f32.partialorder %v2315, 0.0
    %vm2516 = vcmp.gt.f32.partialorder %v2318, 0.0
    %vm2517 = vcmp.gt.f32.partialorder %v2323, 0.0
    %vm2518 = vcmp.gt.f32.partialorder %v2326, 0.0
    %vm2519 = vcmp.gt.f32.partialorder %v2331, 0.0
    %vm2520 = vcmp.gt.f32.partialorder %v2334, 0.0
    %vm2521 = vcmp.gt.f32.partialorder %v2339, 0.0
    %vm2522 = vcmp.gt.f32.partialorder %v2342, 0.0
    %vm2523 = vcmp.gt.f32.partialorder %v2347, 0.0
    %vm2524 = vcmp.gt.f32.partialorder %v2350, 0.0
    %vm2525 = vcmp.gt.f32.partialorder %v2355, 0.0
    %vm2526 = vcmp.gt.f32.partialorder %v2358, 0.0
    %vm2527 = vcmp.gt.f32.partialorder %v2363, 0.0
    %vm2528 = vcmp.gt.f32.partialorder %v2366, 0.0
    %vm2529 = vcmp.gt.f32.partialorder %v2371, 0.0
    %vm2530 = vcmp.gt.f32.partialorder %v2374, 0.0
    %vm2531 = vcmp.gt.f32.partialorder %v2379, 0.0
    %vm2532 = vcmp.gt.f32.partialorder %v2382, 0.0
    %vm2533 = vcmp.gt.f32.partialorder %v2387, 0.0
    %vm2534 = vcmp.gt.f32.partialorder %v2390, 0.0
    %vm2535 = vcmp.gt.f32.partialorder %v2395, 0.0
    %vm2536 = vcmp.gt.f32.partialorder %v2398, 0.0
    %vm2537 = vcmp.gt.f32.partialorder %v2403, 0.0
    %vm2538 = vcmp.gt.f32.partialorder %v2406, 0.0
    %vm2539 = vcmp.gt.f32.partialorder %v2411, 0.0
    %vm2540 = vcmp.gt.f32.partialorder %v2414, 0.0
    %vm2541 = vcmp.gt.f32.partialorder %v2419, 0.0
    %vm2542 = vcmp.gt.f32.partialorder %v2422, 0.0
    %vm2543 = vcmp.gt.f32.partialorder %v2427, 0.0
    %vm2544 = vcmp.gt.f32.partialorder %v2430, 0.0
    %vm2545 = vcmp.gt.f32.partialorder %v2435, 0.0
    %vm2546 = vcmp.gt.f32.partialorder %v2438, 0.0
    %vm2547 = vcmp.gt.f32.partialorder %v2443, 0.0
    %vm2548 = vcmp.gt.f32.partialorder %v2446, 0.0
    %vm2549 = vcmp.gt.f32.partialorder %v2451, 0.0
    %vm2550 = vcmp.gt.f32.partialorder %v2454, 0.0
    %vm2551 = vcmp.gt.f32.partialorder %v2459, 0.0
    %vm2552 = vcmp.gt.f32.partialorder %v2462, 0.0
    %vm2553 = vcmp.gt.f32.partialorder %v2467, 0.0
    %vm2554 = vcmp.gt.f32.partialorder %v2470, 0.0
    %vm2555 = vcmp.gt.f32.partialorder %v2475, 0.0
    %vm2556 = vcmp.gt.f32.partialorder %v2478, 0.0
    %vm2557 = vcmp.gt.f32.partialorder %v2483, 0.0
    %vm2558 = vcmp.gt.f32.partialorder %v2486, 0.0
    %vm2559 = vcmp.gt.f32.partialorder %v2491, 0.0
    %vm2560 = vcmp.gt.f32.partialorder %v2494, 0.0
    %v2561 = vmul.f32 %v2243, 0.01
    %v2562 = vmul.f32 %v2246, 0.01
    %v2563 = vmul.f32 %v2251, 0.01
    %v2564 = vmul.f32 %v2254, 0.01
    %v2565 = vmul.f32 %v2259, 0.01
    %v2566 = vmul.f32 %v2262, 0.01
    %v2567 = vmul.f32 %v2267, 0.01
    %v2568 = vmul.f32 %v2270, 0.01
    %v2569 = vmul.f32 %v2275, 0.01
    %v2570 = vmul.f32 %v2278, 0.01
    %v2571 = vmul.f32 %v2283, 0.01
    %v2572 = vmul.f32 %v2286, 0.01
    %v2573 = vmul.f32 %v2291, 0.01
    %v2574 = vmul.f32 %v2294, 0.01
    %v2575 = vmul.f32 %v2299, 0.01
    %v2576 = vmul.f32 %v2302, 0.01
    %v2577 = vmul.f32 %v2307, 0.01
    %v2578 = vmul.f32 %v2310, 0.01
    %v2579 = vmul.f32 %v2315, 0.01
    %v2580 = vmul.f32 %v2318, 0.01
    %v2581 = vmul.f32 %v2323, 0.01
    %v2582 = vmul.f32 %v2326, 0.01
    %v2583 = vmul.f32 %v2331, 0.01
    %v2584 = vmul.f32 %v2334, 0.01
    %v2585 = vmul.f32 %v2339, 0.01
    %v2586 = vmul.f32 %v2342, 0.01
    %v2587 = vmul.f32 %v2347, 0.01
    %v2588 = vmul.f32 %v2350, 0.01
    %v2589 = vmul.f32 %v2355, 0.01
    %v2590 = vmul.f32 %v2358, 0.01
    %v2591 = vmul.f32 %v2363, 0.01
    %v2592 = vmul.f32 %v2366, 0.01
    %v2593 = vmul.f32 %v2371, 0.01
    %v2594 = vmul.f32 %v2374, 0.01
    %v2595 = vmul.f32 %v2379, 0.01
    %v2596 = vmul.f32 %v2382, 0.01
    %v2597 = vmul.f32 %v2387, 0.01
    %v2598 = vmul.f32 %v2390, 0.01
    %v2599 = vmul.f32 %v2395, 0.01
    %v2600 = vmul.f32 %v2398, 0.01
    %v2601 = vmul.f32 %v2403, 0.01
    %v2602 = vmul.f32 %v2406, 0.01
    %v2603 = vmul.f32 %v2411, 0.01
    %v2604 = vmul.f32 %v2414, 0.01
    %v2605 = vmul.f32 %v2419, 0.01
    %v2606 = vmul.f32 %v2422, 0.01
    %v2607 = vmul.f32 %v2427, 0.01
    %v2608 = vmul.f32 %v2430, 0.01
    %v2609 = vmul.f32 %v2435, 0.01
    %v2610 = vmul.f32 %v2438, 0.01
    %v2611 = vmul.f32 %v2443, 0.01
    %v2612 = vmul.f32 %v2446, 0.01
    %v2613 = vmul.f32 %v2451, 0.01
    %v2614 = vmul.f32 %v2454, 0.01
    %v2615 = vmul.f32 %v2459, 0.01
    %v2616 = vmul.f32 %v2462, 0.01
    %v2617 = vmul.f32 %v2467, 0.01
    %v2618 = vmul.f32 %v2470, 0.01
    %v2619 = vmul.f32 %v2475, 0.01
    %v2620 = vmul.f32 %v2478, 0.01
    %v2621 = vmul.f32 %v2483, 0.01
    %v2622 = vmul.f32 %v2486, 0.01
    %v2623 = vmul.f32 %v2491, 0.01
    %v2624 = vmul.f32 %v2494, 0.01
    %v2625 = vsel %vm2497, %v2243, %v2561
    %v2626 = vsel %vm2498, %v2246, %v2562
    %v2627 = vsel %vm2499, %v2251, %v2563
    %v2628 = vsel %vm2500, %v2254, %v2564
    %v2629 = vsel %vm2501, %v2259, %v2565
    %v2630 = vsel %vm2502, %v2262, %v2566
    %v2631 = vsel %vm2503, %v2267, %v2567
    %v2632 = vsel %vm2504, %v2270, %v2568
    %v2633 = vsel %vm2505, %v2275, %v2569
    %v2634 = vsel %vm2506, %v2278, %v2570
    %v2635 = vsel %vm2507, %v2283, %v2571
    %v2636 = vsel %vm2508, %v2286, %v2572
    %v2637 = vsel %vm2509, %v2291, %v2573
    %v2638 = vsel %vm2510, %v2294, %v2574
    %v2639 = vsel %vm2511, %v2299, %v2575
    %v2640 = vsel %vm2512, %v2302, %v2576
    %v2641 = vsel %vm2513, %v2307, %v2577
    %v2642 = vsel %vm2514, %v2310, %v2578
    %v2643 = vsel %vm2515, %v2315, %v2579
    %v2644 = vsel %vm2516, %v2318, %v2580
    %v2645 = vsel %vm2517, %v2323, %v2581
    %v2646 = vsel %vm2518, %v2326, %v2582
    %v2647 = vsel %vm2519, %v2331, %v2583
    %v2648 = vsel %vm2520, %v2334, %v2584
    %v2649 = vsel %vm2521, %v2339, %v2585
    %v2650 = vsel %vm2522, %v2342, %v2586
    %v2651 = vsel %vm2523, %v2347, %v2587
    %v2652 = vsel %vm2524, %v2350, %v2588
    %v2653 = vsel %vm2525, %v2355, %v2589
    %v2654 = vsel %vm2526, %v2358, %v2590
    %v2655 = vsel %vm2527, %v2363, %v2591
    %v2656 = vsel %vm2528, %v2366, %v2592
    %v2657 = vsel %vm2529, %v2371, %v2593
    %v2658 = vsel %vm2530, %v2374, %v2594
    %v2659 = vsel %vm2531, %v2379, %v2595
    %v2660 = vsel %vm2532, %v2382, %v2596
    %v2661 = vsel %vm2533, %v2387, %v2597
    %v2662 = vsel %vm2534, %v2390, %v2598
    %v2663 = vsel %vm2535, %v2395, %v2599
    %v2664 = vsel %vm2536, %v2398, %v2600
    %v2665 = vsel %vm2537, %v2403, %v2601
    %v2666 = vsel %vm2538, %v2406, %v2602
    %v2667 = vsel %vm2539, %v2411, %v2603
    %v2668 = vsel %vm2540, %v2414, %v2604
    %v2669 = vsel %vm2541, %v2419, %v2605
    %v2670 = vsel %vm2542, %v2422, %v2606
    %v2671 = vsel %vm2543, %v2427, %v2607
    %v2672 = vsel %vm2544, %v2430, %v2608
    %v2673 = vsel %vm2545, %v2435, %v2609
    %v2674 = vsel %vm2546, %v2438, %v2610
    %v2675 = vsel %vm2547, %v2443, %v2611
    %v2676 = vsel %vm2548, %v2446, %v2612
    %v2677 = vsel %vm2549, %v2451, %v2613
    %v2678 = vsel %vm2550, %v2454, %v2614
    %v2679 = vsel %vm2551, %v2459, %v2615
    %v2680 = vsel %vm2552, %v2462, %v2616
    %v2681 = vsel %vm2553, %v2467, %v2617
    %v2682 = vsel %vm2554, %v2470, %v2618
    %v2683 = vsel %vm2555, %v2475, %v2619
    %v2684 = vsel %vm2556, %v2478, %v2620
    %v2685 = vsel %vm2557, %v2483, %v2621
    %v2686 = vsel %vm2558, %v2486, %v2622
    %v2687 = vsel %vm2559, %v2491, %v2623
    %v2688 = vsel %vm2560, %v2494, %v2624
    %vm2689 = vcmask 23552
    %2690 = vst.msk [vmem:[%s3] sm:$0xff] %vm2689, %v2625
    %2691 = vst.msk [vmem:[%s3 + $0x8] sm:$0xff] %vm2689, %v2626
    %2692 = vst.msk [vmem:[%s3 + $0x10] sm:$0xff] %vm2689, %v2627
    %2693 = vst.msk [vmem:[%s3 + $0x18] sm:$0xff] %vm2689, %v2628
    %2694 = vst.msk [vmem:[%s3 + $0x20] sm:$0xff] %vm2689, %v2629
    %2695 = vst.msk [vmem:[%s3 + $0x28] sm:$0xff] %vm2689, %v2630
    %2696 = vst.msk [vmem:[%s3 + $0x30] sm:$0xff] %vm2689, %v2631
    %2697 = vst.msk [vmem:[%s3 + $0x38] sm:$0xff] %vm2689, %v2632
    %2698 = vst.msk [vmem:[%s3 + $0x40] sm:$0xff] %vm2689, %v2633
    %2699 = vst.msk [vmem:[%s3 + $0x48] sm:$0xff] %vm2689, %v2634
    %2700 = vst.msk [vmem:[%s3 + $0x50] sm:$0xff] %vm2689, %v2635
    %2701 = vst.msk [vmem:[%s3 + $0x58] sm:$0xff] %vm2689, %v2636
    %2702 = vst.msk [vmem:[%s3 + $0x60] sm:$0xff] %vm2689, %v2637
    %2703 = vst.msk [vmem:[%s3 + $0x68] sm:$0xff] %vm2689, %v2638
    %2704 = vst.msk [vmem:[%s3 + $0x70] sm:$0xff] %vm2689, %v2639
    %2705 = vst.msk [vmem:[%s3 + $0x78] sm:$0xff] %vm2689, %v2640
    %2706 = vst.msk [vmem:[%s3 + $0x80] sm:$0xff] %vm2689, %v2641
    %2707 = vst.msk [vmem:[%s3 + $0x88] sm:$0xff] %vm2689, %v2642
    %2708 = vst.msk [vmem:[%s3 + $0x90] sm:$0xff] %vm2689, %v2643
    %2709 = vst.msk [vmem:[%s3 + $0x98] sm:$0xff] %vm2689, %v2644
    %2710 = vst.msk [vmem:[%s3 + $0xa0] sm:$0xff] %vm2689, %v2645
    %2711 = vst.msk [vmem:[%s3 + $0xa8] sm:$0xff] %vm2689, %v2646
    %2712 = vst.msk [vmem:[%s3 + $0xb0] sm:$0xff] %vm2689, %v2647
    %2713 = vst.msk [vmem:[%s3 + $0xb8] sm:$0xff] %vm2689, %v2648
    %2714 = vst.msk [vmem:[%s3 + $0xc0] sm:$0xff] %vm2689, %v2649
    %2715 = vst.msk [vmem:[%s3 + $0xc8] sm:$0xff] %vm2689, %v2650
    %2716 = vst.msk [vmem:[%s3 + $0xd0] sm:$0xff] %vm2689, %v2651
    %2717 = vst.msk [vmem:[%s3 + $0xd8] sm:$0xff] %vm2689, %v2652
    %2718 = vst.msk [vmem:[%s3 + $0xe0] sm:$0xff] %vm2689, %v2653
    %2719 = vst.msk [vmem:[%s3 + $0xe8] sm:$0xff] %vm2689, %v2654
    %2720 = vst.msk [vmem:[%s3 + $0xf0] sm:$0xff] %vm2689, %v2655
    %2721 = vst.msk [vmem:[%s3 + $0xf8] sm:$0xff] %vm2689, %v2656
    %2722 = vst.msk [vmem:[%s3 + $0x100] sm:$0xff] %vm2689, %v2657
    %2723 = vst.msk [vmem:[%s3 + $0x108] sm:$0xff] %vm2689, %v2658
    %2724 = vst.msk [vmem:[%s3 + $0x110] sm:$0xff] %vm2689, %v2659
    %2725 = vst.msk [vmem:[%s3 + $0x118] sm:$0xff] %vm2689, %v2660
    %2726 = vst.msk [vmem:[%s3 + $0x120] sm:$0xff] %vm2689, %v2661
    %2727 = vst.msk [vmem:[%s3 + $0x128] sm:$0xff] %vm2689, %v2662
    %2728 = vst.msk [vmem:[%s3 + $0x130] sm:$0xff] %vm2689, %v2663
    %2729 = vst.msk [vmem:[%s3 + $0x138] sm:$0xff] %vm2689, %v2664
    %2730 = vst.msk [vmem:[%s3 + $0x140] sm:$0xff] %vm2689, %v2665
    %2731 = vst.msk [vmem:[%s3 + $0x148] sm:$0xff] %vm2689, %v2666
    %2732 = vst.msk [vmem:[%s3 + $0x150] sm:$0xff] %vm2689, %v2667
    %2733 = vst.msk [vmem:[%s3 + $0x158] sm:$0xff] %vm2689, %v2668
    %2734 = vst.msk [vmem:[%s3 + $0x160] sm:$0xff] %vm2689, %v2669
    %2735 = vst.msk [vmem:[%s3 + $0x168] sm:$0xff] %vm2689, %v2670
    %2736 = vst.msk [vmem:[%s3 + $0x170] sm:$0xff] %vm2689, %v2671
    %2737 = vst.msk [vmem:[%s3 + $0x178] sm:$0xff] %vm2689, %v2672
    %2738 = vst.msk [vmem:[%s3 + $0x180] sm:$0xff] %vm2689, %v2673
    %2739 = vst.msk [vmem:[%s3 + $0x188] sm:$0xff] %vm2689, %v2674
    %2740 = vst.msk [vmem:[%s3 + $0x190] sm:$0xff] %vm2689, %v2675
    %2741 = vst.msk [vmem:[%s3 + $0x198] sm:$0xff] %vm2689, %v2676
    %2742 = vst.msk [vmem:[%s3 + $0x1a0] sm:$0xff] %vm2689, %v2677
    %2743 = vst.msk [vmem:[%s3 + $0x1a8] sm:$0xff] %vm2689, %v2678
    %2744 = vst.msk [vmem:[%s3 + $0x1b0] sm:$0xff] %vm2689, %v2679
    %2745 = vst.msk [vmem:[%s3 + $0x1b8] sm:$0xff] %vm2689, %v2680
    %2746 = vst.msk [vmem:[%s3 + $0x1c0] sm:$0xff] %vm2689, %v2681
    %2747 = vst.msk [vmem:[%s3 + $0x1c8] sm:$0xff] %vm2689, %v2682
    %2748 = vst.msk [vmem:[%s3 + $0x1d0] sm:$0xff] %vm2689, %v2683
    %2749 = vst.msk [vmem:[%s3 + $0x1d8] sm:$0xff] %vm2689, %v2684
    %2750 = vst.msk [vmem:[%s3 + $0x1e0] sm:$0xff] %vm2689, %v2685
    %2751 = vst.msk [vmem:[%s3 + $0x1e8] sm:$0xff] %vm2689, %v2686
    %2752 = vst.msk [vmem:[%s3 + $0x1f0] sm:$0xff] %vm2689, %v2687
    %2753 = vst.msk [vmem:[%s3 + $0x1f8] sm:$0xff] %vm2689, %v2688
    // Predicated region
    $region26: #{tpu_custom_call.1} parent=1 // pred_check
      _
    $region27: #{tpu_custom_call.1} parent=1 // pred_check_branch
      %2755 = sbr.rel (0) target = $region29
    $region28: #{tpu_custom_call.1} parent=1 // pred_region
      _
    $region29: #{tpu_custom_call.1} parent=1 // pred_fallthru
      _
    // Predicated region
    $region30: #{tpu_custom_call.1} parent=1 // pred_check
      _
    $region31: #{tpu_custom_call.1} parent=1 // pred_check_branch
      %2757 = sbr.rel (0) target = $region33
    $region32: #{tpu_custom_call.1} parent=1 // pred_region
      _
    $region33: #{tpu_custom_call.1} parent=1 // pred_fallthru
      _
    %2758 = vsyncpa [#allocation3], 1
    %2759 = vsyncpa [#allocation5], 1

</llo_original>
